<compile_context>
chip_gen: v7x
topology: tpu7x:2x2x1
jax: 0.10.0
libtpu: 0.0.40
codegen_flags: <defaults>
</compile_context>

<pallas_src>
import math
from functools import partial
from typing import NamedTuple

import numpy as np
import jax
import jax.numpy as jnp
from jax.experimental import pallas as pl
from jax.experimental.pallas import tpu as pltpu


def _up(n, m):
    return -(-n // m) * m


class _Cfg(NamedTuple):
    B: int
    C8: int
    CB: int
    hid: int
    h4: int
    P0: int
    P1: int
    P2: int
    # bf16 weight-slab row offsets
    o_w1: int
    o_w2: int
    o_w3: int
    o_c1: int
    o_c2: int
    o_wh: int
    # f32 bias-slab row offsets
    o_b1: int
    o_b2: int
    o_b3: int
    o_cb1: int
    o_cb2: int
    o_bh: int


# ----------------------------- kernel ---------------------------------------


def _conv_decoder_kernel(x_ref, w_ref, b_ref, a1_ref, a2_ref, out_ref, *, cfg: _Cfg):
    f32, bf16 = jnp.float32, jnp.bfloat16
    B, CB, hid, h4 = cfg.B, cfg.CB, cfg.hid, cfg.h4
    C8, P0, P1, P2 = cfg.C8, cfg.P0, cfg.P1, cfg.P2

    # ---------------- MLP, lane-dense: activations are (B, h4) ----------------
    xb = x_ref[...].astype(bf16)
    h = jnp.dot(xb, w_ref[cfg.o_w1:cfg.o_w1 + hid, 0:h4],
                preferred_element_type=f32) + b_ref[cfg.o_b1:cfg.o_b1 + 1, 0:h4]
    h = jnp.maximum(h, 0.0)
    h = jnp.dot(h.astype(bf16), w_ref[cfg.o_w2:cfg.o_w2 + h4, 0:h4],
                preferred_element_type=f32) + b_ref[cfg.o_b2:cfg.o_b2 + 1, 0:h4]
    hb = jnp.maximum(h, 0.0).astype(bf16)                              # (B, h4)

    # ---- last Linear emitted directly in the transposed decoder layout ------
    #   x0[c*B + b, p] = sum_k h[b, k] * W3[k, c*P0 + p] + b3[c*P0 + p]
    #   C8 lane-dense matmuls with full h4 contraction, then a tiny sublane concat.
    blocks = []
    for c in range(C8):
        w3c = w_ref[cfg.o_w3 + c * h4:cfg.o_w3 + (c + 1) * h4, 0:P0]   # (h4, P0) bf16
        blocks.append(jnp.dot(hb, w3c, preferred_element_type=f32))    # (B, P0)
    x0 = jnp.concatenate(blocks, axis=0) + b_ref[cfg.o_b3:cfg.o_b3 + CB, 0:P0]

    # -------- Upsample(bilinear) + Conv3x3(pad=1) + ReLU, transposed ----------
    #   out = relu( sum_t kron(W_t^T, I_B) @ X @ A_t^T + b )
    #   one (9*CB, CB) channel-mix matmul, then 9 lane-dense (CB, P_out) tap matmuls
    #   against the constant A_t^T row-blocks, accumulated in f32.
    def stage(x_in, o_w, a_ref, p_in, bcol):
        wst = w_ref[o_w:o_w + 9 * CB, 0:CB]                            # (9*CB, CB) bf16
        z = jnp.dot(wst, x_in.astype(bf16), preferred_element_type=f32)  # (9*CB, p_in) f32
        acc = None
        for t in range(9):
            zt = z[t * CB:(t + 1) * CB, :].astype(bf16)                # (CB, p_in)
            at = a_ref[t * p_in:(t + 1) * p_in, :]                     # (p_in, p_out) bf16
            y = jnp.dot(zt, at, preferred_element_type=f32)            # (CB, p_out) lane-dense
            acc = y if acc is None else acc + y
        return jnp.maximum(acc + bcol, 0.0)

    cb1 = b_ref[cfg.o_cb1:cfg.o_cb1 + CB, 0:1]
    cb2 = b_ref[cfg.o_cb2:cfg.o_cb2 + CB, 0:1]
    h1 = stage(x0, cfg.o_c1, a1_ref, P0, cb1)                          # (CB, P1)
    h2 = stage(h1, cfg.o_c2, a2_ref, P1, cb2)                          # (CB, P2)

    # ---- fused 1x1-conv heads, lane-dense (CB, P2) output (rows >= 2B are zero) ----
    wh = w_ref[cfg.o_wh:cfg.o_wh + CB, 0:CB]                           # (CB, CB) bf16
    bh = b_ref[cfg.o_bh:cfg.o_bh + CB, 0:1]
    out_ref[...] = jnp.dot(wh, h2.astype(bf16), preferred_element_type=f32) + bh


# ------------------------- structural glue (numpy) --------------------------


def _upsample_matrix(in_size, out_size):
    """PyTorch nn.Upsample(mode='bilinear', align_corners=False) as an (out,in) matrix."""
    U = np.zeros((out_size, in_size), np.float64)
    scale = in_size / out_size
    for i in range(out_size):
        src = max((i + 0.5) * scale - 0.5, 0.0)
        i0 = min(int(np.floor(src)), in_size - 1)
        i1 = min(i0 + 1, in_size - 1)
        f = src - i0
        U[i, i0] += (1.0 - f)
        U[i, i1] += f
    return U


def _shift_matrix(H, W, dy, dx):
    """Zero-padded 3x3-conv tap (dy,dx) as a (HW,HW) 0/1 selection matrix."""
    S = np.zeros((H * W, H * W), np.float64)
    for y in range(H):
        for x in range(W):
            sy, sx = y + dy - 1, x + dx - 1
            if 0 <= sy < H and 0 <= sx < W:
                S[y * W + x, sy * W + sx] = 1.0
    return S


def _tap_upsample_ops(in_hw, out_hw):
    """A_t = S_t @ kron(Uh, Uw) for the 9 conv taps. Shape (9, Hout*Wout, Hin*Win)."""
    Hi, Wi = in_hw
    Ho, Wo = out_hw
    U = np.kron(_upsample_matrix(Hi, Ho), _upsample_matrix(Wi, Wo))
    taps = []
    for dy in range(3):
        for dx in range(3):
            taps.append(_shift_matrix(Ho, Wo, dy, dx) @ U)
    return np.stack(taps, axis=0).astype(np.float32)


# ----------------------------- module --------------------------------------


class ConvDecoderPallas:
    def __init__(self, Rworld_shape, hidden_dim, key):
        assert hidden_dim % 8 == 0 and hidden_dim >= 16
        self.hidden_dim = hidden_dim
        self.h4 = hidden_dim * 4
        self.RRworld_shape = tuple(x // 32 for x in Rworld_shape)
        self.hw16 = tuple(x // 16 for x in Rworld_shape)
        self.hw8 = tuple(x // 8 for x in Rworld_shape)
        C8 = hidden_dim // 8
        self.C8 = C8
        self.P0 = self.RRworld_shape[0] * self.RRworld_shape[1]
        self.P1 = self.hw16[0] * self.hw16[1]
        self.P2 = self.hw8[0] * self.hw8[1]
        h4 = self.h4
        n3 = C8 * self.P0

        ks = jax.random.split(key, 14)

        def lin(kw, kb, fin, fout):
            s = 1.0 / math.sqrt(fin)
            return (jax.random.uniform(kw, (fin, fout), jnp.float32, -s, s),
                    jax.random.uniform(kb, (fout,), jnp.float32, -s, s))

        self._w1, self._b1 = lin(ks[0], ks[1], hidden_dim, h4)
        self._w2, self._b2 = lin(ks[2], ks[3], h4, h4)
        self._w3, self._b3 = lin(ks[4], ks[5], h4, n3)

        def conv3x3(kw, kb, cin, cout):
            s = 1.0 / math.sqrt(cin * 9)
            w = jax.random.uniform(kw, (cout, cin, 3, 3), jnp.float32, -s, s)  # PyTorch layout
            b = jax.random.uniform(kb, (cout,), jnp.float32, -s, s)
            return w, b

        w1raw, self._cb1 = conv3x3(ks[6], ks[7], C8, C8)
        w2raw, self._cb2 = conv3x3(ks[8], ks[9], C8, C8)
        # tap-major views, tap index t = ky*3 + kx:
        self._cw1 = jnp.transpose(w1raw, (2, 3, 1, 0)).reshape(9, C8, C8)   # (t, cin, cout) ref
        self._cw2 = jnp.transpose(w2raw, (2, 3, 1, 0)).reshape(9, C8, C8)
        self._cw1t = jnp.transpose(w1raw, (2, 3, 0, 1)).reshape(9, C8, C8)  # (t, cout, cin) kernel
        self._cw2t = jnp.transpose(w2raw, (2, 3, 0, 1)).reshape(9, C8, C8)

        def conv1x1(kw, kb, cin):
            s = 1.0 / math.sqrt(cin)
            return (jax.random.uniform(kw, (cin,), jnp.float32, -s, s),
                    jax.random.uniform(kb, (), jnp.float32, -s, s))

        wcov, bcov = conv1x1(ks[10], ks[11], C8)
        wheat, bheat = conv1x1(ks[12], ks[13], C8)
        self._whead = jnp.stack([wcov, wheat], axis=0)   # (2, C8): row0=covermap, row1=heatmap
        self._bhead = jnp.stack([bcov, bheat], axis=0)   # (2,)

        # exact fused (bilinear-upsample -> conv-tap shift) operators.
        A1 = _tap_upsample_ops(self.RRworld_shape, self.hw16)   # (9, P1, P0)
        A2 = _tap_upsample_ops(self.hw16, self.hw8)             # (9, P2, P1)
        self._A1taps = jnp.asarray(A1)        # kept only for the pure-JAX sanity check
        self._A2taps = jnp.asarray(A2)
        # A_stack_T[t*P_in + pi, po] = A_t[po, pi]; entries are exact in bf16.
        self.a1t = jnp.asarray(np.transpose(A1, (0, 2, 1)).reshape(9 * self.P0, self.P1),
                               dtype=jnp.bfloat16)
        self.a2t = jnp.asarray(np.transpose(A2, (0, 2, 1)).reshape(9 * self.P1, self.P2),
                               dtype=jnp.bfloat16)

        self._packed_cache = {}

    # ---- batch-dependent constant packing (done once per batch size, outside the kernel)

    def _packed(self, B):
        if B in self._packed_cache:
            return self._packed_cache[B]
        C8, P0, P1, P2 = self.C8, self.P0, self.P1, self.P2
        hid, h4 = self.hidden_dim, self.h4
        CB = C8 * B
        assert 2 * B <= CB, "needs hidden_dim // 8 >= 2 so both heads fit in the CB output rows"
        eyeB = np.eye(B, dtype=np.float32)

        # ---------------- bf16 weight slab (16-row aligned sections) ----------------
        o_w1 = 0
        o_w2 = _up(o_w1 + hid, 16)
        o_w3 = _up(o_w2 + h4, 16)
        o_c1 = _up(o_w3 + C8 * h4, 16)
        o_c2 = _up(o_c1 + 9 * CB, 16)
        o_wh = _up(o_c2 + 9 * CB, 16)
        wrows = _up(o_wh + CB, 16)
        wcols = max(h4, P0, CB)
        wslab = np.zeros((wrows, wcols), np.float32)
        wslab[o_w1:o_w1 + hid, :h4] = np.asarray(self._w1)
        wslab[o_w2:o_w2 + h4, :h4] = np.asarray(self._w2)
        w3 = np.asarray(self._w3)                                  # (h4, C8*P0)
        for c in range(C8):
            wslab[o_w3 + c * h4:o_w3 + (c + 1) * h4, :P0] = w3[:, c * P0:(c + 1) * P0]

        def kron_stack(wt_coci):                                   # (9,co,ci) -> (9*CB, CB)
            blk = np.einsum('toi,ab->toaib', np.asarray(wt_coci), eyeB)
            return blk.reshape(9 * CB, CB)

        wslab[o_c1:o_c1 + 9 * CB, :CB] = kron_stack(self._cw1t)
        wslab[o_c2:o_c2 + 9 * CB, :CB] = kron_stack(self._cw2t)
        whb = np.einsum('hc,ab->hacb', np.asarray(self._whead), eyeB).reshape(2 * B, CB)
        wslab[o_wh:o_wh + 2 * B, :CB] = whb                        # rows [2B:CB] stay zero

        # ---------------- f32 bias slab (8-row aligned sections) ----------------
        o_b1 = 0
        o_b2 = 8
        o_b3 = 16
        o_cb1 = _up(o_b3 + CB, 8)
        o_cb2 = o_cb1 + _up(CB, 8)
        o_bh = o_cb2 + _up(CB, 8)
        brows = o_bh + _up(CB, 8)
        bcols = max(h4, P0)
        bslab = np.zeros((brows, bcols), np.float32)
        bslab[o_b1, :h4] = np.asarray(self._b1)
        bslab[o_b2, :h4] = np.asarray(self._b2)
        bslab[o_b3:o_b3 + CB, :P0] = np.repeat(np.asarray(self._b3).reshape(C8, P0), B, axis=0)
        bslab[o_cb1:o_cb1 + CB, 0] = np.repeat(np.asarray(self._cb1), B)
        bslab[o_cb2:o_cb2 + CB, 0] = np.repeat(np.asarray(self._cb2), B)
        bslab[o_bh:o_bh + 2 * B, 0] = np.repeat(np.asarray(self._bhead), B)

        cfg = _Cfg(B=B, C8=C8, CB=CB, hid=hid, h4=h4, P0=P0, P1=P1, P2=P2,
                   o_w1=o_w1, o_w2=o_w2, o_w3=o_w3, o_c1=o_c1, o_c2=o_c2, o_wh=o_wh,
                   o_b1=o_b1, o_b2=o_b2, o_b3=o_b3, o_cb1=o_cb1, o_cb2=o_cb2, o_bh=o_bh)
        packed = dict(cfg=cfg,
                      wslab=jnp.asarray(wslab, dtype=jnp.bfloat16),
                      bslab=jnp.asarray(bslab, dtype=jnp.float32))
        self._packed_cache[B] = packed
        return packed

    # ---- forward (matches PyTorch ConvDecoder.forward) ----

    def forward(self, x):
        B = x.shape[0]
        pk = self._packed(B)
        cfg = pk['cfg']
        out = pl.pallas_call(
            partial(_conv_decoder_kernel, cfg=cfg),
            out_shape=jax.ShapeDtypeStruct((cfg.CB, self.P2), jnp.float32),
            compiler_params=pltpu.CompilerParams(
                # explicit scoped-VMEM budget; scales with Rworld (A2 operator dominates).
                vmem_limit_bytes=32 * 1024 * 1024),
        )(x, pk['wslab'], pk['bslab'], self.a1t, self.a2t)
        H8, W8 = self.hw8
        covermap = out[0:B].reshape(B, 1, H8, W8)      # NCHW (B, 1, H/8, W/8)
        heatmap = out[B:2 * B].reshape(B, 1, H8, W8)
        return covermap, heatmap


# ----------------------------- reference (sanity check) ---------------------


def _reference_forward(model, x):
    """Straight-layout pure-JAX reference of the same math (high precision, f32)."""
    hp = jax.lax.Precision.HIGHEST
    B = x.shape[0]
    h = jnp.maximum(jnp.dot(x, model._w1, precision=hp) + model._b1, 0.0)
    h = jnp.maximum(jnp.dot(h, model._w2, precision=hp) + model._b2, 0.0)
    flat = jnp.dot(h, model._w3, precision=hp) + model._b3
    feat = flat.reshape(B, model.C8, model.P0)

    def stage(xbcp, a_taps, w_taps, bias):
        y = jnp.einsum('tqp,bcp,tcd->bdq', a_taps, xbcp, w_taps, precision=hp)
        return jnp.maximum(y + bias[None, :, None], 0.0)

    h1 = stage(feat, model._A1taps, model._cw1, model._cb1)
    h2 = stage(h1, model._A2taps, model._cw2, model._cb2)
    heads = jnp.einsum('hc,bcp->bhp', model._whead, h2, precision=hp) + model._bhead[None, :, None]
    H8, W8 = model.hw8
    return heads[:, 0].reshape(B, 1, H8, W8), heads[:, 1].reshape(B, 1, H8, W8)


# ----------------------------- main -----------------------------------------

if __name__ == "__main__":
    key = jax.random.PRNGKey(0)
    k_param, k_x = jax.random.split(key)

    hidden_dim = 32
    Rworld_shape = (128, 128)        # -> RRworld (4,4), heads output (B,1,16,16)
    B = 2

    model = ConvDecoderPallas(Rworld_shape, hidden_dim, k_param)
    x = jax.random.normal(k_x, (B, hidden_dim), jnp.float32)

    covermap, heatmap = model.forward(x)
    covermap = jax.block_until_ready(covermap)
    heatmap = jax.block_until_ready(heatmap)

    assert covermap.shape == (B, 1, Rworld_shape[0] // 8, Rworld_shape[1] // 8)
    assert heatmap.shape == (B, 1, Rworld_shape[0] // 8, Rworld_shape[1] // 8)
    assert bool(jnp.all(jnp.isfinite(covermap))) and bool(jnp.all(jnp.isfinite(heatmap)))

    # sanity-check against the pure-JAX f32 reference (bf16 operands in-kernel -> loose tol)
    cov_ref, heat_ref = _reference_forward(model, x)

    def _rel_err(a, b):
        return float(jnp.linalg.norm(a - b) / (jnp.linalg.norm(b) + 1e-8))

    assert _rel_err(covermap, cov_ref) < 5e-2, _rel_err(covermap, cov_ref)
    assert _rel_err(heatmap, heat_ref) < 5e-2, _rel_err(heatmap, heat_ref)

    print("KERNEL_OK")
</pallas_src>

<mosaic_0001>
module attributes {stable_mosaic.version = 11 : i64} {
  func.func @_conv_decoder_kernel(%arg0: memref<2x32xf32, #tpu.memory_space<vmem>>, %arg1: memref<848x128xbf16, #tpu.memory_space<vmem>>, %arg2: memref<48x128xf32, #tpu.memory_space<vmem>>, %arg3: memref<144x64xbf16, #tpu.memory_space<vmem>>, %arg4: memref<576x256xbf16, #tpu.memory_space<vmem>>, %arg5: memref<8x256xf32, #tpu.memory_space<vmem>>) attributes {dimension_semantics = [], scalar_prefetch = 0 : i64, scratch_operands = 0 : i64, tpu.core_type = #tpu.core_type<tc>} {
    %c0 = arith.constant 0 : index
    %c0_0 = arith.constant 0 : index
    %0 = vector.load %arg0[%c0, %c0_0] : memref<2x32xf32, #tpu.memory_space<vmem>>, vector<2x32xf32>
    %1 = arith.truncf %0 : vector<2x32xf32> to vector<2x32xbf16>
    %c0_1 = arith.constant 0 : index
    %c0_2 = arith.constant 0 : index
    %2 = vector.load %arg1[%c0_1, %c0_2] : memref<848x128xbf16, #tpu.memory_space<vmem>>, vector<32x128xbf16>
    %cst = arith.constant dense<0.000000e+00> : vector<2x128xf32>
    %3 = tpu.matmul %1, %2, %cst {dimension_numbers = #tpu.dot_dimension_numbers<[1], [0], [0], [1], [0, 0, 1, 1], [], []>} : vector<2x32xbf16>, vector<32x128xbf16>, vector<2x128xf32> -> vector<2x128xf32>
    %c0_3 = arith.constant 0 : index
    %c0_4 = arith.constant 0 : index
    %4 = vector.load %arg2[%c0_3, %c0_4] : memref<48x128xf32, #tpu.memory_space<vmem>>, vector<1x128xf32>
    %5 = vector.broadcast %4 : vector<1x128xf32> to vector<2x128xf32>
    %6 = arith.addf %3, %5 : vector<2x128xf32>
    %cst_5 = arith.constant 0.000000e+00 : f32
    %7 = vector.broadcast %cst_5 : f32 to vector<2x128xf32>
    %8 = arith.maximumf %6, %7 : vector<2x128xf32>
    %9 = arith.truncf %8 : vector<2x128xf32> to vector<2x128xbf16>
    %c32 = arith.constant 32 : index
    %c0_6 = arith.constant 0 : index
    %10 = vector.load %arg1[%c32, %c0_6] : memref<848x128xbf16, #tpu.memory_space<vmem>>, vector<128x128xbf16>
    %cst_7 = arith.constant dense<0.000000e+00> : vector<2x128xf32>
    %11 = tpu.matmul %9, %10, %cst_7 {dimension_numbers = #tpu.dot_dimension_numbers<[1], [0], [0], [1], [0, 0, 1, 1], [], []>} : vector<2x128xbf16>, vector<128x128xbf16>, vector<2x128xf32> -> vector<2x128xf32>
    %c8 = arith.constant 8 : index
    %c0_8 = arith.constant 0 : index
    %12 = vector.load %arg2[%c8, %c0_8] : memref<48x128xf32, #tpu.memory_space<vmem>>, vector<1x128xf32>
    %13 = vector.broadcast %12 : vector<1x128xf32> to vector<2x128xf32>
    %14 = arith.addf %11, %13 : vector<2x128xf32>
    %cst_9 = arith.constant 0.000000e+00 : f32
    %15 = vector.broadcast %cst_9 : f32 to vector<2x128xf32>
    %16 = arith.maximumf %14, %15 : vector<2x128xf32>
    %17 = arith.truncf %16 : vector<2x128xf32> to vector<2x128xbf16>
    %c160 = arith.constant 160 : index
    %c0_10 = arith.constant 0 : index
    %18 = vector.load %arg1[%c160, %c0_10] : memref<848x128xbf16, #tpu.memory_space<vmem>>, vector<128x16xbf16>
    %cst_11 = arith.constant dense<0.000000e+00> : vector<2x16xf32>
    %19 = tpu.matmul %17, %18, %cst_11 {dimension_numbers = #tpu.dot_dimension_numbers<[1], [0], [0], [1], [0, 0, 1, 1], [], []>} : vector<2x128xbf16>, vector<128x16xbf16>, vector<2x16xf32> -> vector<2x16xf32>
    %c288 = arith.constant 288 : index
    %c0_12 = arith.constant 0 : index
    %20 = vector.load %arg1[%c288, %c0_12] : memref<848x128xbf16, #tpu.memory_space<vmem>>, vector<128x16xbf16>
    %cst_13 = arith.constant dense<0.000000e+00> : vector<2x16xf32>
    %21 = tpu.matmul %17, %20, %cst_13 {dimension_numbers = #tpu.dot_dimension_numbers<[1], [0], [0], [1], [0, 0, 1, 1], [], []>} : vector<2x128xbf16>, vector<128x16xbf16>, vector<2x16xf32> -> vector<2x16xf32>
    %c416 = arith.constant 416 : index
    %c0_14 = arith.constant 0 : index
    %22 = vector.load %arg1[%c416, %c0_14] : memref<848x128xbf16, #tpu.memory_space<vmem>>, vector<128x16xbf16>
    %cst_15 = arith.constant dense<0.000000e+00> : vector<2x16xf32>
    %23 = tpu.matmul %17, %22, %cst_15 {dimension_numbers = #tpu.dot_dimension_numbers<[1], [0], [0], [1], [0, 0, 1, 1], [], []>} : vector<2x128xbf16>, vector<128x16xbf16>, vector<2x16xf32> -> vector<2x16xf32>
    %c544 = arith.constant 544 : index
    %c0_16 = arith.constant 0 : index
    %24 = vector.load %arg1[%c544, %c0_16] : memref<848x128xbf16, #tpu.memory_space<vmem>>, vector<128x16xbf16>
    %cst_17 = arith.constant dense<0.000000e+00> : vector<2x16xf32>
    %25 = tpu.matmul %17, %24, %cst_17 {dimension_numbers = #tpu.dot_dimension_numbers<[1], [0], [0], [1], [0, 0, 1, 1], [], []>} : vector<2x128xbf16>, vector<128x16xbf16>, vector<2x16xf32> -> vector<2x16xf32>
    %26 = tpu.concatenate %19, %21, %23, %25 in 0 : vector<2x16xf32>, vector<2x16xf32>, vector<2x16xf32>, vector<2x16xf32> -> vector<8x16xf32>
    %c16 = arith.constant 16 : index
    %c0_18 = arith.constant 0 : index
    %27 = vector.load %arg2[%c16, %c0_18] : memref<48x128xf32, #tpu.memory_space<vmem>>, vector<8x16xf32>
    %28 = arith.addf %26, %27 : vector<8x16xf32>
    %c24 = arith.constant 24 : index
    %c0_19 = arith.constant 0 : index
    %29 = vector.load %arg2[%c24, %c0_19] : memref<48x128xf32, #tpu.memory_space<vmem>>, vector<8x1xf32>
    %c32_20 = arith.constant 32 : index
    %c0_21 = arith.constant 0 : index
    %30 = vector.load %arg2[%c32_20, %c0_21] : memref<48x128xf32, #tpu.memory_space<vmem>>, vector<8x1xf32>
    %c672 = arith.constant 672 : index
    %c0_22 = arith.constant 0 : index
    %31 = vector.load %arg1[%c672, %c0_22] : memref<848x128xbf16, #tpu.memory_space<vmem>>, vector<72x8xbf16>
    %32 = arith.truncf %28 : vector<8x16xf32> to vector<8x16xbf16>
    %cst_23 = arith.constant dense<0.000000e+00> : vector<72x16xf32>
    %33 = tpu.matmul %31, %32, %cst_23 {dimension_numbers = #tpu.dot_dimension_numbers<[1], [0], [0], [1], [0, 0, 1, 1], [], []>} : vector<72x8xbf16>, vector<8x16xbf16>, vector<72x16xf32> -> vector<72x16xf32>
    %34 = vector.extract_strided_slice %33 {offsets = [0, 0], sizes = [8, 16], strides = [1, 1]} : vector<72x16xf32> to vector<8x16xf32>
    %35 = arith.truncf %34 : vector<8x16xf32> to vector<8x16xbf16>
    %c0_24 = arith.constant 0 : index
    %c0_25 = arith.constant 0 : index
    %36 = vector.load %arg3[%c0_24, %c0_25] : memref<144x64xbf16, #tpu.memory_space<vmem>>, vector<16x64xbf16>
    %cst_26 = arith.constant dense<0.000000e+00> : vector<8x64xf32>
    %37 = tpu.matmul %35, %36, %cst_26 {dimension_numbers = #tpu.dot_dimension_numbers<[1], [0], [0], [1], [0, 0, 1, 1], [], []>} : vector<8x16xbf16>, vector<16x64xbf16>, vector<8x64xf32> -> vector<8x64xf32>
    %38 = vector.extract_strided_slice %33 {offsets = [8, 0], sizes = [8, 16], strides = [1, 1]} : vector<72x16xf32> to vector<8x16xf32>
    %39 = arith.truncf %38 : vector<8x16xf32> to vector<8x16xbf16>
    %c16_27 = arith.constant 16 : index
    %c0_28 = arith.constant 0 : index
    %40 = vector.load %arg3[%c16_27, %c0_28] : memref<144x64xbf16, #tpu.memory_space<vmem>>, vector<16x64xbf16>
    %cst_29 = arith.constant dense<0.000000e+00> : vector<8x64xf32>
    %41 = tpu.matmul %39, %40, %cst_29 {dimension_numbers = #tpu.dot_dimension_numbers<[1], [0], [0], [1], [0, 0, 1, 1], [], []>} : vector<8x16xbf16>, vector<16x64xbf16>, vector<8x64xf32> -> vector<8x64xf32>
    %42 = arith.addf %37, %41 : vector<8x64xf32>
    %43 = vector.extract_strided_slice %33 {offsets = [16, 0], sizes = [8, 16], strides = [1, 1]} : vector<72x16xf32> to vector<8x16xf32>
    %44 = arith.truncf %43 : vector<8x16xf32> to vector<8x16xbf16>
    %c32_30 = arith.constant 32 : index
    %c0_31 = arith.constant 0 : index
    %45 = vector.load %arg3[%c32_30, %c0_31] : memref<144x64xbf16, #tpu.memory_space<vmem>>, vector<16x64xbf16>
    %cst_32 = arith.constant dense<0.000000e+00> : vector<8x64xf32>
    %46 = tpu.matmul %44, %45, %cst_32 {dimension_numbers = #tpu.dot_dimension_numbers<[1], [0], [0], [1], [0, 0, 1, 1], [], []>} : vector<8x16xbf16>, vector<16x64xbf16>, vector<8x64xf32> -> vector<8x64xf32>
    %47 = arith.addf %42, %46 : vector<8x64xf32>
    %48 = vector.extract_strided_slice %33 {offsets = [24, 0], sizes = [8, 16], strides = [1, 1]} : vector<72x16xf32> to vector<8x16xf32>
    %49 = arith.truncf %48 : vector<8x16xf32> to vector<8x16xbf16>
    %c48 = arith.constant 48 : index
    %c0_33 = arith.constant 0 : index
    %50 = vector.load %arg3[%c48, %c0_33] : memref<144x64xbf16, #tpu.memory_space<vmem>>, vector<16x64xbf16>
    %cst_34 = arith.constant dense<0.000000e+00> : vector<8x64xf32>
    %51 = tpu.matmul %49, %50, %cst_34 {dimension_numbers = #tpu.dot_dimension_numbers<[1], [0], [0], [1], [0, 0, 1, 1], [], []>} : vector<8x16xbf16>, vector<16x64xbf16>, vector<8x64xf32> -> vector<8x64xf32>
    %52 = arith.addf %47, %51 : vector<8x64xf32>
    %53 = vector.extract_strided_slice %33 {offsets = [32, 0], sizes = [8, 16], strides = [1, 1]} : vector<72x16xf32> to vector<8x16xf32>
    %54 = arith.truncf %53 : vector<8x16xf32> to vector<8x16xbf16>
    %c64 = arith.constant 64 : index
    %c0_35 = arith.constant 0 : index
    %55 = vector.load %arg3[%c64, %c0_35] : memref<144x64xbf16, #tpu.memory_space<vmem>>, vector<16x64xbf16>
    %cst_36 = arith.constant dense<0.000000e+00> : vector<8x64xf32>
    %56 = tpu.matmul %54, %55, %cst_36 {dimension_numbers = #tpu.dot_dimension_numbers<[1], [0], [0], [1], [0, 0, 1, 1], [], []>} : vector<8x16xbf16>, vector<16x64xbf16>, vector<8x64xf32> -> vector<8x64xf32>
    %57 = arith.addf %52, %56 : vector<8x64xf32>
    %58 = vector.extract_strided_slice %33 {offsets = [40, 0], sizes = [8, 16], strides = [1, 1]} : vector<72x16xf32> to vector<8x16xf32>
    %59 = arith.truncf %58 : vector<8x16xf32> to vector<8x16xbf16>
    %c80 = arith.constant 80 : index
    %c0_37 = arith.constant 0 : index
    %60 = vector.load %arg3[%c80, %c0_37] : memref<144x64xbf16, #tpu.memory_space<vmem>>, vector<16x64xbf16>
    %cst_38 = arith.constant dense<0.000000e+00> : vector<8x64xf32>
    %61 = tpu.matmul %59, %60, %cst_38 {dimension_numbers = #tpu.dot_dimension_numbers<[1], [0], [0], [1], [0, 0, 1, 1], [], []>} : vector<8x16xbf16>, vector<16x64xbf16>, vector<8x64xf32> -> vector<8x64xf32>
    %62 = arith.addf %57, %61 : vector<8x64xf32>
    %63 = vector.extract_strided_slice %33 {offsets = [48, 0], sizes = [8, 16], strides = [1, 1]} : vector<72x16xf32> to vector<8x16xf32>
    %64 = arith.truncf %63 : vector<8x16xf32> to vector<8x16xbf16>
    %c96 = arith.constant 96 : index
    %c0_39 = arith.constant 0 : index
    %65 = vector.load %arg3[%c96, %c0_39] : memref<144x64xbf16, #tpu.memory_space<vmem>>, vector<16x64xbf16>
    %cst_40 = arith.constant dense<0.000000e+00> : vector<8x64xf32>
    %66 = tpu.matmul %64, %65, %cst_40 {dimension_numbers = #tpu.dot_dimension_numbers<[1], [0], [0], [1], [0, 0, 1, 1], [], []>} : vector<8x16xbf16>, vector<16x64xbf16>, vector<8x64xf32> -> vector<8x64xf32>
    %67 = arith.addf %62, %66 : vector<8x64xf32>
    %68 = vector.extract_strided_slice %33 {offsets = [56, 0], sizes = [8, 16], strides = [1, 1]} : vector<72x16xf32> to vector<8x16xf32>
    %69 = arith.truncf %68 : vector<8x16xf32> to vector<8x16xbf16>
    %c112 = arith.constant 112 : index
    %c0_41 = arith.constant 0 : index
    %70 = vector.load %arg3[%c112, %c0_41] : memref<144x64xbf16, #tpu.memory_space<vmem>>, vector<16x64xbf16>
    %cst_42 = arith.constant dense<0.000000e+00> : vector<8x64xf32>
    %71 = tpu.matmul %69, %70, %cst_42 {dimension_numbers = #tpu.dot_dimension_numbers<[1], [0], [0], [1], [0, 0, 1, 1], [], []>} : vector<8x16xbf16>, vector<16x64xbf16>, vector<8x64xf32> -> vector<8x64xf32>
    %72 = arith.addf %67, %71 : vector<8x64xf32>
    %73 = vector.extract_strided_slice %33 {offsets = [64, 0], sizes = [8, 16], strides = [1, 1]} : vector<72x16xf32> to vector<8x16xf32>
    %74 = arith.truncf %73 : vector<8x16xf32> to vector<8x16xbf16>
    %c128 = arith.constant 128 : index
    %c0_43 = arith.constant 0 : index
    %75 = vector.load %arg3[%c128, %c0_43] : memref<144x64xbf16, #tpu.memory_space<vmem>>, vector<16x64xbf16>
    %cst_44 = arith.constant dense<0.000000e+00> : vector<8x64xf32>
    %76 = tpu.matmul %74, %75, %cst_44 {dimension_numbers = #tpu.dot_dimension_numbers<[1], [0], [0], [1], [0, 0, 1, 1], [], []>} : vector<8x16xbf16>, vector<16x64xbf16>, vector<8x64xf32> -> vector<8x64xf32>
    %77 = arith.addf %72, %76 : vector<8x64xf32>
    %78 = vector.broadcast %29 : vector<8x1xf32> to vector<8x64xf32>
    %79 = arith.addf %77, %78 : vector<8x64xf32>
    %cst_45 = arith.constant 0.000000e+00 : f32
    %80 = vector.broadcast %cst_45 : f32 to vector<8x64xf32>
    %81 = arith.maximumf %79, %80 : vector<8x64xf32>
    %c752 = arith.constant 752 : index
    %c0_46 = arith.constant 0 : index
    %82 = vector.load %arg1[%c752, %c0_46] : memref<848x128xbf16, #tpu.memory_space<vmem>>, vector<72x8xbf16>
    %83 = arith.truncf %81 : vector<8x64xf32> to vector<8x64xbf16>
    %cst_47 = arith.constant dense<0.000000e+00> : vector<72x64xf32>
    %84 = tpu.matmul %82, %83, %cst_47 {dimension_numbers = #tpu.dot_dimension_numbers<[1], [0], [0], [1], [0, 0, 1, 1], [], []>} : vector<72x8xbf16>, vector<8x64xbf16>, vector<72x64xf32> -> vector<72x64xf32>
    %85 = vector.extract_strided_slice %84 {offsets = [0, 0], sizes = [8, 64], strides = [1, 1]} : vector<72x64xf32> to vector<8x64xf32>
    %86 = arith.truncf %85 : vector<8x64xf32> to vector<8x64xbf16>
    %c0_48 = arith.constant 0 : index
    %c0_49 = arith.constant 0 : index
    %87 = vector.load %arg4[%c0_48, %c0_49] : memref<576x256xbf16, #tpu.memory_space<vmem>>, vector<64x256xbf16>
    %cst_50 = arith.constant dense<0.000000e+00> : vector<8x256xf32>
    %88 = tpu.matmul %86, %87, %cst_50 {dimension_numbers = #tpu.dot_dimension_numbers<[1], [0], [0], [1], [0, 0, 1, 1], [], []>} : vector<8x64xbf16>, vector<64x256xbf16>, vector<8x256xf32> -> vector<8x256xf32>
    %89 = vector.extract_strided_slice %84 {offsets = [8, 0], sizes = [8, 64], strides = [1, 1]} : vector<72x64xf32> to vector<8x64xf32>
    %90 = arith.truncf %89 : vector<8x64xf32> to vector<8x64xbf16>
    %c64_51 = arith.constant 64 : index
    %c0_52 = arith.constant 0 : index
    %91 = vector.load %arg4[%c64_51, %c0_52] : memref<576x256xbf16, #tpu.memory_space<vmem>>, vector<64x256xbf16>
    %cst_53 = arith.constant dense<0.000000e+00> : vector<8x256xf32>
    %92 = tpu.matmul %90, %91, %cst_53 {dimension_numbers = #tpu.dot_dimension_numbers<[1], [0], [0], [1], [0, 0, 1, 1], [], []>} : vector<8x64xbf16>, vector<64x256xbf16>, vector<8x256xf32> -> vector<8x256xf32>
    %93 = arith.addf %88, %92 : vector<8x256xf32>
    %94 = vector.extract_strided_slice %84 {offsets = [16, 0], sizes = [8, 64], strides = [1, 1]} : vector<72x64xf32> to vector<8x64xf32>
    %95 = arith.truncf %94 : vector<8x64xf32> to vector<8x64xbf16>
    %c128_54 = arith.constant 128 : index
    %c0_55 = arith.constant 0 : index
    %96 = vector.load %arg4[%c128_54, %c0_55] : memref<576x256xbf16, #tpu.memory_space<vmem>>, vector<64x256xbf16>
    %cst_56 = arith.constant dense<0.000000e+00> : vector<8x256xf32>
    %97 = tpu.matmul %95, %96, %cst_56 {dimension_numbers = #tpu.dot_dimension_numbers<[1], [0], [0], [1], [0, 0, 1, 1], [], []>} : vector<8x64xbf16>, vector<64x256xbf16>, vector<8x256xf32> -> vector<8x256xf32>
    %98 = arith.addf %93, %97 : vector<8x256xf32>
    %99 = vector.extract_strided_slice %84 {offsets = [24, 0], sizes = [8, 64], strides = [1, 1]} : vector<72x64xf32> to vector<8x64xf32>
    %100 = arith.truncf %99 : vector<8x64xf32> to vector<8x64xbf16>
    %c192 = arith.constant 192 : index
    %c0_57 = arith.constant 0 : index
    %101 = vector.load %arg4[%c192, %c0_57] : memref<576x256xbf16, #tpu.memory_space<vmem>>, vector<64x256xbf16>
    %cst_58 = arith.constant dense<0.000000e+00> : vector<8x256xf32>
    %102 = tpu.matmul %100, %101, %cst_58 {dimension_numbers = #tpu.dot_dimension_numbers<[1], [0], [0], [1], [0, 0, 1, 1], [], []>} : vector<8x64xbf16>, vector<64x256xbf16>, vector<8x256xf32> -> vector<8x256xf32>
    %103 = arith.addf %98, %102 : vector<8x256xf32>
    %104 = vector.extract_strided_slice %84 {offsets = [32, 0], sizes = [8, 64], strides = [1, 1]} : vector<72x64xf32> to vector<8x64xf32>
    %105 = arith.truncf %104 : vector<8x64xf32> to vector<8x64xbf16>
    %c256 = arith.constant 256 : index
    %c0_59 = arith.constant 0 : index
    %106 = vector.load %arg4[%c256, %c0_59] : memref<576x256xbf16, #tpu.memory_space<vmem>>, vector<64x256xbf16>
    %cst_60 = arith.constant dense<0.000000e+00> : vector<8x256xf32>
    %107 = tpu.matmul %105, %106, %cst_60 {dimension_numbers = #tpu.dot_dimension_numbers<[1], [0], [0], [1], [0, 0, 1, 1], [], []>} : vector<8x64xbf16>, vector<64x256xbf16>, vector<8x256xf32> -> vector<8x256xf32>
    %108 = arith.addf %103, %107 : vector<8x256xf32>
    %109 = vector.extract_strided_slice %84 {offsets = [40, 0], sizes = [8, 64], strides = [1, 1]} : vector<72x64xf32> to vector<8x64xf32>
    %110 = arith.truncf %109 : vector<8x64xf32> to vector<8x64xbf16>
    %c320 = arith.constant 320 : index
    %c0_61 = arith.constant 0 : index
    %111 = vector.load %arg4[%c320, %c0_61] : memref<576x256xbf16, #tpu.memory_space<vmem>>, vector<64x256xbf16>
    %cst_62 = arith.constant dense<0.000000e+00> : vector<8x256xf32>
    %112 = tpu.matmul %110, %111, %cst_62 {dimension_numbers = #tpu.dot_dimension_numbers<[1], [0], [0], [1], [0, 0, 1, 1], [], []>} : vector<8x64xbf16>, vector<64x256xbf16>, vector<8x256xf32> -> vector<8x256xf32>
    %113 = arith.addf %108, %112 : vector<8x256xf32>
    %114 = vector.extract_strided_slice %84 {offsets = [48, 0], sizes = [8, 64], strides = [1, 1]} : vector<72x64xf32> to vector<8x64xf32>
    %115 = arith.truncf %114 : vector<8x64xf32> to vector<8x64xbf16>
    %c384 = arith.constant 384 : index
    %c0_63 = arith.constant 0 : index
    %116 = vector.load %arg4[%c384, %c0_63] : memref<576x256xbf16, #tpu.memory_space<vmem>>, vector<64x256xbf16>
    %cst_64 = arith.constant dense<0.000000e+00> : vector<8x256xf32>
    %117 = tpu.matmul %115, %116, %cst_64 {dimension_numbers = #tpu.dot_dimension_numbers<[1], [0], [0], [1], [0, 0, 1, 1], [], []>} : vector<8x64xbf16>, vector<64x256xbf16>, vector<8x256xf32> -> vector<8x256xf32>
    %118 = arith.addf %113, %117 : vector<8x256xf32>
    %119 = vector.extract_strided_slice %84 {offsets = [56, 0], sizes = [8, 64], strides = [1, 1]} : vector<72x64xf32> to vector<8x64xf32>
    %120 = arith.truncf %119 : vector<8x64xf32> to vector<8x64xbf16>
    %c448 = arith.constant 448 : index
    %c0_65 = arith.constant 0 : index
    %121 = vector.load %arg4[%c448, %c0_65] : memref<576x256xbf16, #tpu.memory_space<vmem>>, vector<64x256xbf16>
    %cst_66 = arith.constant dense<0.000000e+00> : vector<8x256xf32>
    %122 = tpu.matmul %120, %121, %cst_66 {dimension_numbers = #tpu.dot_dimension_numbers<[1], [0], [0], [1], [0, 0, 1, 1], [], []>} : vector<8x64xbf16>, vector<64x256xbf16>, vector<8x256xf32> -> vector<8x256xf32>
    %123 = arith.addf %118, %122 : vector<8x256xf32>
    %124 = vector.extract_strided_slice %84 {offsets = [64, 0], sizes = [8, 64], strides = [1, 1]} : vector<72x64xf32> to vector<8x64xf32>
    %125 = arith.truncf %124 : vector<8x64xf32> to vector<8x64xbf16>
    %c512 = arith.constant 512 : index
    %c0_67 = arith.constant 0 : index
    %126 = vector.load %arg4[%c512, %c0_67] : memref<576x256xbf16, #tpu.memory_space<vmem>>, vector<64x256xbf16>
    %cst_68 = arith.constant dense<0.000000e+00> : vector<8x256xf32>
    %127 = tpu.matmul %125, %126, %cst_68 {dimension_numbers = #tpu.dot_dimension_numbers<[1], [0], [0], [1], [0, 0, 1, 1], [], []>} : vector<8x64xbf16>, vector<64x256xbf16>, vector<8x256xf32> -> vector<8x256xf32>
    %128 = arith.addf %123, %127 : vector<8x256xf32>
    %129 = vector.broadcast %30 : vector<8x1xf32> to vector<8x256xf32>
    %130 = arith.addf %128, %129 : vector<8x256xf32>
    %cst_69 = arith.constant 0.000000e+00 : f32
    %131 = vector.broadcast %cst_69 : f32 to vector<8x256xf32>
    %132 = arith.maximumf %130, %131 : vector<8x256xf32>
    %c832 = arith.constant 832 : index
    %c0_70 = arith.constant 0 : index
    %133 = vector.load %arg1[%c832, %c0_70] : memref<848x128xbf16, #tpu.memory_space<vmem>>, vector<8x8xbf16>
    %c40 = arith.constant 40 : index
    %c0_71 = arith.constant 0 : index
    %134 = vector.load %arg2[%c40, %c0_71] : memref<48x128xf32, #tpu.memory_space<vmem>>, vector<8x1xf32>
    %135 = arith.truncf %132 : vector<8x256xf32> to vector<8x256xbf16>
    %cst_72 = arith.constant dense<0.000000e+00> : vector<8x256xf32>
    %136 = tpu.matmul %133, %135, %cst_72 {dimension_numbers = #tpu.dot_dimension_numbers<[1], [0], [0], [1], [0, 0, 1, 1], [], []>} : vector<8x8xbf16>, vector<8x256xbf16>, vector<8x256xf32> -> vector<8x256xf32>
    %137 = vector.broadcast %134 : vector<8x1xf32> to vector<8x256xf32>
    %138 = arith.addf %136, %137 : vector<8x256xf32>
    %c0_73 = arith.constant 0 : index
    %c0_74 = arith.constant 0 : index
    %139 = vector.load %arg5[%c0_73, %c0_74] : memref<8x256xf32, #tpu.memory_space<vmem>>, vector<8x256xf32>
    tpu.vector_store %arg5[%c0_73, %c0_74], %138 {strides = array<i32>} : memref<8x256xf32, #tpu.memory_space<vmem>>, vector<8x256xf32>,
    return
  }
}

</mosaic_0001>

<llo_original>
// kernel: tpu_custom_call.1
$region0: #{tpu_custom_call.1}
  #allocation0 [shape = 'u32[]', space=smem, size = 0x4, offset = 0x4, fixed_abs, tag = 'smem constant byte address 0x4 - core index']
  #allocation1 [shape = 'u32[144,128]{1,0:T(1,128)}', space=vmem, size = 0x12000, scoped, tag = 'internal scratch']
  %s0 = inlined_call_operand.vmem [shape: f32[2,32], index: 0, kind: input, shape index: {}]
  %s1 = inlined_call_operand.hbm [shape: bf16[848,128], index: 1, kind: input, shape index: {}]
  %s2 = inlined_call_operand.vmem [shape: f32[48,128], index: 2, kind: input, shape index: {}]
  %s3 = inlined_call_operand.vmem [shape: bf16[144,64], index: 3, kind: input, shape index: {}]
  %s4 = inlined_call_operand.hbm [shape: bf16[576,256], index: 4, kind: input, shape index: {}]
  %s5 = inlined_call_operand.hbm [shape: f32[8,256], index: 5, kind: output, shape index: {}]
  %s6 = sld [smem:[#allocation0]]
  $region38: #{tpu_custom_call.1} parent=0
    _
  %s8 = ssub.s32 1, %s6
  %s9 = scalar_select 0, %s8, %s6
  $region1: #{tpu_custom_call.1} parent=0
    #allocation2 [shape = 'u8[217088]{0}', space=vmem, size = 0x35000, scoped, tag = 'input window, operand 1, single buffered']
    #allocation3 [shape = 's32[1]{0}', space=sflag, size = 0x4, scoped, tag = 'scoped memory for tpu_custom_call.1']
    #allocation4 [shape = 's32[1]{0}', space=sflag, size = 0x4, scoped, tag = 'scoped memory for tpu_custom_call.1']
    #allocation5 [shape = 'u8[294912]{0}', space=vmem, size = 0x48000, scoped, tag = 'input window, operand 4, single buffered']
    #allocation6 [shape = 's32[1]{0}', space=sflag, size = 0x4, scoped, tag = 'scoped memory for tpu_custom_call.1']
    #allocation7 [shape = 'u8[8192]{0}', space=vmem, size = 0x2000, scoped, tag = 'output window, operand 0, single buffered']
    %10 = vsyncpa [#allocation3], 0
    %11 = vsyncpa [#allocation6], 0
    %12 = vsyncpa [#allocation4], 0
    // Predicated region
    $region2: #{tpu_custom_call.1} parent=1 // pred_check
      _
    $region3: #{tpu_custom_call.1} parent=1 // pred_check_branch
      %14 = sbr.rel (0) target = $region5
    $region4: #{tpu_custom_call.1} parent=1 // pred_region
      _
    $region5: #{tpu_custom_call.1} parent=1 // pred_fallthru
      _
    // Predicated region
    $region6: #{tpu_custom_call.1} parent=1 // pred_check
      _
    $region7: #{tpu_custom_call.1} parent=1 // pred_check_branch
      %16 = sbr.rel (0) target = $region9
    $region8: #{tpu_custom_call.1} parent=1 // pred_region
      %s18 = ssub.s32 6784, 6784
      %19 = vsyncadd [#allocation3], %s18
      %s20 = sshll.u32 [#allocation2], 4
      %s21 = int_to_ptr.vmem [resolvable:$true] %s20
      %26 = dma.hbm_to_vmem [thread:$0]  %s1, 6784, %s21, [#allocation3], 64, 64, 4
    $region9: #{tpu_custom_call.1} parent=1 // pred_fallthru
      _
    // Predicated region
    $region10: #{tpu_custom_call.1} parent=1 // pred_check
      _
    $region11: #{tpu_custom_call.1} parent=1 // pred_check_branch
      %28 = sbr.rel (0) target = $region13
    $region12: #{tpu_custom_call.1} parent=1 // pred_region
      _
    $region13: #{tpu_custom_call.1} parent=1 // pred_fallthru
      _
    // Predicated region
    $region14: #{tpu_custom_call.1} parent=1 // pred_check
      _
    $region15: #{tpu_custom_call.1} parent=1 // pred_check_branch
      %30 = sbr.rel (0) target = $region17
    $region16: #{tpu_custom_call.1} parent=1 // pred_region
      _
    $region17: #{tpu_custom_call.1} parent=1 // pred_fallthru
      _
    // Predicated region
    $region18: #{tpu_custom_call.1} parent=1 // pred_check
      _
    $region19: #{tpu_custom_call.1} parent=1 // pred_check_branch
      %32 = sbr.rel (0) target = $region21
    $region20: #{tpu_custom_call.1} parent=1 // pred_region
      %s34 = ssub.s32 9216, 9216
      %35 = vsyncadd [#allocation6], %s34
      %s36 = sshll.u32 [#allocation5], 4
      %s37 = int_to_ptr.vmem [resolvable:$true] %s36
      %42 = dma.hbm_to_vmem [thread:$0]  %s4, 9216, %s37, [#allocation6], 128, 128, 8
    $region21: #{tpu_custom_call.1} parent=1 // pred_fallthru
      _
    // Predicated region
    $region22: #{tpu_custom_call.1} parent=1 // pred_check
      _
    $region23: #{tpu_custom_call.1} parent=1 // pred_check_branch
      %44 = sbr.rel (0) target = $region25
    $region24: #{tpu_custom_call.1} parent=1 // pred_region
      %45 = dma.done [#allocation3], 6784
    $region25: #{tpu_custom_call.1} parent=1 // pred_fallthru
      _
    // Predicated region
    $region26: #{tpu_custom_call.1} parent=1 // pred_check
      _
    $region27: #{tpu_custom_call.1} parent=1 // pred_check_branch
      %47 = sbr.rel (0) target = $region29
    $region28: #{tpu_custom_call.1} parent=1 // pred_region
      %48 = dma.done [#allocation6], 9216
    $region29: #{tpu_custom_call.1} parent=1 // pred_fallthru
      _
    %v50 = vld [vmem:[%s0] sm:$0x3]
    %v51 = vpack.c.bf16 %v50, %v50
    %v52 = vld [vmem:[#allocation2] sm:$0xf]
    %v53 = vld [vmem:[#allocation2 + $0x4] sm:$0xf]
    %v54 = vld [vmem:[#allocation2 + $0x8] sm:$0xf]
    %v55 = vld [vmem:[#allocation2 + $0xc] sm:$0xf]
    %v56 = vld [vmem:[%s2] sm:$0x1]
    %v57 = vlaneseq
    %v58 = vshrl.u32 %v57, 7
    %v59 = vsub.s32 0, %v58
    %v60 = vrot.slane %v56, %v59
    %v65 = vunpack.c.l.b16 %v52
    %v66 = vunpack.c.l.b16 %v53
    %v67 = vunpack.c.l.b16 %v54
    %v68 = vunpack.c.l.b16 %v55
    %v69 = vpack.c.b16 %v66, %v65
    %v70 = vpack.c.b16 %v68, %v67
    %vm73 = vcmask 261120
    %v75 = vsel %vm73, %v51, 0
    %77 = vmatprep.subr.bf16.mxu0 0
    %78 = vmatpush1.bf16.msra.mxu0 %v69
    %79 = vmatprep.subr.bf16.mxu0 0
    %80 = vmatpush1.bf16.msra.mxu0 %v70
    %81 = vmatprep.subr.bf16.mxu0 0
    %82 = vmatpush1.bf16.msra.mxu0 0
    %83 = vmatprep.subr.bf16.mxu0 0
    %84 = vmatpush1.bf16.msra.mxu0 0
    %85 = vmatprep.subr.bf16.mxu0 0
    %86 = vmatpush1.bf16.msra.mxu0 0
    %87 = vmatprep.subr.bf16.mxu0 0
    %88 = vmatpush1.bf16.msra.mxu0 0
    %89 = vmatprep.subr.bf16.mxu0 0
    %90 = vmatpush1.bf16.msra.mxu0 0
    %91 = vmatprep.subr.bf16.mxu0 0
    %92 = vmatpush1.bf16.msra.mxu0 0
    %93 = vmatprep.subr.bf16.mxu0 0
    %94 = vmatpush1.bf16.msra.mxu0 0
    %95 = vmatprep.subr.bf16.mxu0 0
    %96 = vmatpush1.bf16.msra.mxu0 0
    %97 = vmatprep.subr.bf16.mxu0 0
    %98 = vmatpush1.bf16.msra.mxu0 0
    %99 = vmatprep.subr.bf16.mxu0 0
    %100 = vmatpush1.bf16.msra.mxu0 0
    %101 = vmatprep.subr.bf16.mxu0 0
    %102 = vmatpush1.bf16.msra.mxu0 0
    %103 = vmatprep.subr.bf16.mxu0 0
    %104 = vmatpush1.bf16.msra.mxu0 0
    %105 = vmatprep.subr.bf16.mxu0 0
    %106 = vmatpush1.bf16.msra.mxu0 0
    %107 = vmatprep.subr.bf16.mxu0 0
    %108 = vmatpush1.bf16.msra.mxu0 0
    %109 = vmatprep.mubr.bf16.mxu0 0
    %110 = vmatmul.mubr.bf16.gmra.mrb[0].mxu0 %v75
    %v111 = vpop.f32.mrb[0].mxu0
    %v112 = vadd.f32 %v60, %v111
    %v113 = vpop.f32.mrb[0].mxu0
    %v114 = vpop.f32.mrb[0].mxu0
    %v115 = vpop.f32.mrb[0].mxu0
    %116 = vdwg.mxu0
    %v117 = vmax.f32 %v112, 0.0
    %v118 = vpack.c.bf16 %v117, %v117
    %v119 = vld [vmem:[#allocation2 + $0x10] sm:$0xf]
    %v120 = vld [vmem:[#allocation2 + $0x14] sm:$0xf]
    %v121 = vld [vmem:[#allocation2 + $0x18] sm:$0xf]
    %v122 = vld [vmem:[#allocation2 + $0x1c] sm:$0xf]
    %v123 = vld [vmem:[#allocation2 + $0x20] sm:$0xf]
    %v124 = vld [vmem:[#allocation2 + $0x24] sm:$0xf]
    %v125 = vld [vmem:[#allocation2 + $0x28] sm:$0xf]
    %v126 = vld [vmem:[#allocation2 + $0x2c] sm:$0xf]
    %v127 = vld [vmem:[#allocation2 + $0x30] sm:$0xf]
    %v128 = vld [vmem:[#allocation2 + $0x34] sm:$0xf]
    %v129 = vld [vmem:[#allocation2 + $0x38] sm:$0xf]
    %v130 = vld [vmem:[#allocation2 + $0x3c] sm:$0xf]
    %v131 = vld [vmem:[#allocation2 + $0x40] sm:$0xf]
    %v132 = vld [vmem:[#allocation2 + $0x44] sm:$0xf]
    %v133 = vld [vmem:[#allocation2 + $0x48] sm:$0xf]
    %v134 = vld [vmem:[#allocation2 + $0x4c] sm:$0xf]
    %v135 = vld [vmem:[%s2 + $0x8] sm:$0x1]
    %v136 = vlaneseq
    %v137 = vshrl.u32 %v136, 7
    %v138 = vsub.s32 0, %v137
    %v139 = vrot.slane %v135, %v138
    %v156 = vunpack.c.l.b16 %v119
    %v157 = vunpack.c.l.b16 %v120
    %v158 = vunpack.c.l.b16 %v121
    %v159 = vunpack.c.l.b16 %v122
    %v160 = vunpack.c.l.b16 %v123
    %v161 = vunpack.c.l.b16 %v124
    %v162 = vunpack.c.l.b16 %v125
    %v163 = vunpack.c.l.b16 %v126
    %v164 = vunpack.c.l.b16 %v127
    %v165 = vunpack.c.l.b16 %v128
    %v166 = vunpack.c.l.b16 %v129
    %v167 = vunpack.c.l.b16 %v130
    %v168 = vunpack.c.l.b16 %v131
    %v169 = vunpack.c.l.b16 %v132
    %v170 = vunpack.c.l.b16 %v133
    %v171 = vunpack.c.l.b16 %v134
    %v172 = vpack.c.b16 %v157, %v156
    %v173 = vpack.c.b16 %v159, %v158
    %v174 = vpack.c.b16 %v161, %v160
    %v175 = vpack.c.b16 %v163, %v162
    %v176 = vpack.c.b16 %v165, %v164
    %v177 = vpack.c.b16 %v167, %v166
    %v178 = vpack.c.b16 %v169, %v168
    %v179 = vpack.c.b16 %v171, %v170
    %188 = vmatprep.subr.bf16.mxu0 0
    %189 = vmatpush1.bf16.msra.mxu0 %v172
    %190 = vmatprep.subr.bf16.mxu0 0
    %191 = vmatpush1.bf16.msra.mxu0 %v173
    %192 = vmatprep.subr.bf16.mxu0 0
    %193 = vmatpush1.bf16.msra.mxu0 %v174
    %194 = vmatprep.subr.bf16.mxu0 0
    %195 = vmatpush1.bf16.msra.mxu0 %v175
    %196 = vmatprep.subr.bf16.mxu0 0
    %197 = vmatpush1.bf16.msra.mxu0 %v176
    %198 = vmatprep.subr.bf16.mxu0 0
    %199 = vmatpush1.bf16.msra.mxu0 %v177
    %200 = vmatprep.subr.bf16.mxu0 0
    %201 = vmatpush1.bf16.msra.mxu0 %v178
    %202 = vmatprep.subr.bf16.mxu0 0
    %203 = vmatpush1.bf16.msra.mxu0 %v179
    %204 = vmatprep.subr.bf16.mxu0 0
    %205 = vmatpush1.bf16.msra.mxu0 0
    %206 = vmatprep.subr.bf16.mxu0 0
    %207 = vmatpush1.bf16.msra.mxu0 0
    %208 = vmatprep.subr.bf16.mxu0 0
    %209 = vmatpush1.bf16.msra.mxu0 0
    %210 = vmatprep.subr.bf16.mxu0 0
    %211 = vmatpush1.bf16.msra.mxu0 0
    %212 = vmatprep.subr.bf16.mxu0 0
    %213 = vmatpush1.bf16.msra.mxu0 0
    %214 = vmatprep.subr.bf16.mxu0 0
    %215 = vmatpush1.bf16.msra.mxu0 0
    %216 = vmatprep.subr.bf16.mxu0 0
    %217 = vmatpush1.bf16.msra.mxu0 0
    %218 = vmatprep.subr.bf16.mxu0 0
    %219 = vmatpush1.bf16.msra.mxu0 0
    %220 = vmatprep.mubr.bf16.mxu0 0
    %221 = vmatmul.mubr.bf16.gmra.mrb[0].mxu0 %v118
    %v222 = vpop.f32.mrb[0].mxu0
    %v223 = vadd.f32 %v139, %v222
    %v224 = vpop.f32.mrb[0].mxu0
    %v225 = vpop.f32.mrb[0].mxu0
    %v226 = vpop.f32.mrb[0].mxu0
    %227 = vdwg.mxu0
    %v228 = vmax.f32 %v223, 0.0
    %v229 = vpack.c.bf16 %v228, %v228
    %v230 = vld [vmem:[#allocation2 + $0x50] sm:$0xf]
    %v231 = vld [vmem:[#allocation2 + $0x54] sm:$0xf]
    %v232 = vld [vmem:[#allocation2 + $0x58] sm:$0xf]
    %v233 = vld [vmem:[#allocation2 + $0x5c] sm:$0xf]
    %v234 = vld [vmem:[#allocation2 + $0x60] sm:$0xf]
    %v235 = vld [vmem:[#allocation2 + $0x64] sm:$0xf]
    %v236 = vld [vmem:[#allocation2 + $0x68] sm:$0xf]
    %v237 = vld [vmem:[#allocation2 + $0x6c] sm:$0xf]
    %v238 = vld [vmem:[#allocation2 + $0x70] sm:$0xf]
    %v239 = vld [vmem:[#allocation2 + $0x74] sm:$0xf]
    %v240 = vld [vmem:[#allocation2 + $0x78] sm:$0xf]
    %v241 = vld [vmem:[#allocation2 + $0x7c] sm:$0xf]
    %v242 = vld [vmem:[#allocation2 + $0x80] sm:$0xf]
    %v243 = vld [vmem:[#allocation2 + $0x84] sm:$0xf]
    %v244 = vld [vmem:[#allocation2 + $0x88] sm:$0xf]
    %v245 = vld [vmem:[#allocation2 + $0x8c] sm:$0xf]
    %v262 = vunpack.c.l.b16 %v230
    %v263 = vunpack.c.l.b16 %v231
    %v264 = vunpack.c.l.b16 %v232
    %v265 = vunpack.c.l.b16 %v233
    %v266 = vunpack.c.l.b16 %v234
    %v267 = vunpack.c.l.b16 %v235
    %v268 = vunpack.c.l.b16 %v236
    %v269 = vunpack.c.l.b16 %v237
    %v270 = vunpack.c.l.b16 %v238
    %v271 = vunpack.c.l.b16 %v239
    %v272 = vunpack.c.l.b16 %v240
    %v273 = vunpack.c.l.b16 %v241
    %v274 = vunpack.c.l.b16 %v242
    %v275 = vunpack.c.l.b16 %v243
    %v276 = vunpack.c.l.b16 %v244
    %v277 = vunpack.c.l.b16 %v245
    %v278 = vpack.c.b16 %v263, %v262
    %v279 = vpack.c.b16 %v265, %v264
    %v280 = vpack.c.b16 %v267, %v266
    %v281 = vpack.c.b16 %v269, %v268
    %v282 = vpack.c.b16 %v271, %v270
    %v283 = vpack.c.b16 %v273, %v272
    %v284 = vpack.c.b16 %v275, %v274
    %v285 = vpack.c.b16 %v277, %v276
    %294 = vmatprep.subr.bf16.mxu0 0
    %295 = vmatpush1.bf16.msra.mxu0 %v278
    %296 = vmatprep.subr.bf16.mxu0 0
    %297 = vmatpush1.bf16.msra.mxu0 %v279
    %298 = vmatprep.subr.bf16.mxu0 0
    %299 = vmatpush1.bf16.msra.mxu0 %v280
    %300 = vmatprep.subr.bf16.mxu0 0
    %301 = vmatpush1.bf16.msra.mxu0 %v281
    %302 = vmatprep.subr.bf16.mxu0 0
    %303 = vmatpush1.bf16.msra.mxu0 %v282
    %304 = vmatprep.subr.bf16.mxu0 0
    %305 = vmatpush1.bf16.msra.mxu0 %v283
    %306 = vmatprep.subr.bf16.mxu0 0
    %307 = vmatpush1.bf16.msra.mxu0 %v284
    %308 = vmatprep.subr.bf16.mxu0 0
    %309 = vmatpush1.bf16.msra.mxu0 %v285
    %310 = vmatprep.subr.bf16.mxu0 0
    %311 = vmatpush1.bf16.msra.mxu0 0
    %312 = vmatprep.subr.bf16.mxu0 0
    %313 = vmatpush1.bf16.msra.mxu0 0
    %314 = vmatprep.subr.bf16.mxu0 0
    %315 = vmatpush1.bf16.msra.mxu0 0
    %316 = vmatprep.subr.bf16.mxu0 0
    %317 = vmatpush1.bf16.msra.mxu0 0
    %318 = vmatprep.subr.bf16.mxu0 0
    %319 = vmatpush1.bf16.msra.mxu0 0
    %320 = vmatprep.subr.bf16.mxu0 0
    %321 = vmatpush1.bf16.msra.mxu0 0
    %322 = vmatprep.subr.bf16.mxu0 0
    %323 = vmatpush1.bf16.msra.mxu0 0
    %324 = vmatprep.subr.bf16.mxu0 0
    %325 = vmatpush1.bf16.msra.mxu0 0
    %326 = vmatprep.mubr.bf16.mxu0 0
    %327 = vmatmul.mubr.bf16.gmra.mrb[0].mxu0 %v229
    %v328 = vpop.f32.mrb[0].mxu0
    %v329 = vadd.f32 0.0, %v328
    %v330 = vpop.f32.mrb[0].mxu0
    %v331 = vpop.f32.mrb[0].mxu0
    %v332 = vpop.f32.mrb[0].mxu0
    %333 = vdwg.mxu0
    %v334 = vld [vmem:[#allocation2 + $0x90] sm:$0xf]
    %v335 = vld [vmem:[#allocation2 + $0x94] sm:$0xf]
    %v336 = vld [vmem:[#allocation2 + $0x98] sm:$0xf]
    %v337 = vld [vmem:[#allocation2 + $0x9c] sm:$0xf]
    %v338 = vld [vmem:[#allocation2 + $0xa0] sm:$0xf]
    %v339 = vld [vmem:[#allocation2 + $0xa4] sm:$0xf]
    %v340 = vld [vmem:[#allocation2 + $0xa8] sm:$0xf]
    %v341 = vld [vmem:[#allocation2 + $0xac] sm:$0xf]
    %v342 = vld [vmem:[#allocation2 + $0xb0] sm:$0xf]
    %v343 = vld [vmem:[#allocation2 + $0xb4] sm:$0xf]
    %v344 = vld [vmem:[#allocation2 + $0xb8] sm:$0xf]
    %v345 = vld [vmem:[#allocation2 + $0xbc] sm:$0xf]
    %v346 = vld [vmem:[#allocation2 + $0xc0] sm:$0xf]
    %v347 = vld [vmem:[#allocation2 + $0xc4] sm:$0xf]
    %v348 = vld [vmem:[#allocation2 + $0xc8] sm:$0xf]
    %v349 = vld [vmem:[#allocation2 + $0xcc] sm:$0xf]
    %v366 = vunpack.c.l.b16 %v334
    %v367 = vunpack.c.l.b16 %v335
    %v368 = vunpack.c.l.b16 %v336
    %v369 = vunpack.c.l.b16 %v337
    %v370 = vunpack.c.l.b16 %v338
    %v371 = vunpack.c.l.b16 %v339
    %v372 = vunpack.c.l.b16 %v340
    %v373 = vunpack.c.l.b16 %v341
    %v374 = vunpack.c.l.b16 %v342
    %v375 = vunpack.c.l.b16 %v343
    %v376 = vunpack.c.l.b16 %v344
    %v377 = vunpack.c.l.b16 %v345
    %v378 = vunpack.c.l.b16 %v346
    %v379 = vunpack.c.l.b16 %v347
    %v380 = vunpack.c.l.b16 %v348
    %v381 = vunpack.c.l.b16 %v349
    %v382 = vpack.c.b16 %v367, %v366
    %v383 = vpack.c.b16 %v369, %v368
    %v384 = vpack.c.b16 %v371, %v370
    %v385 = vpack.c.b16 %v373, %v372
    %v386 = vpack.c.b16 %v375, %v374
    %v387 = vpack.c.b16 %v377, %v376
    %v388 = vpack.c.b16 %v379, %v378
    %v389 = vpack.c.b16 %v381, %v380
    %398 = vmatprep.subr.bf16.mxu0 0
    %399 = vmatpush1.bf16.msra.mxu0 %v382
    %400 = vmatprep.subr.bf16.mxu0 0
    %401 = vmatpush1.bf16.msra.mxu0 %v383
    %402 = vmatprep.subr.bf16.mxu0 0
    %403 = vmatpush1.bf16.msra.mxu0 %v384
    %404 = vmatprep.subr.bf16.mxu0 0
    %405 = vmatpush1.bf16.msra.mxu0 %v385
    %406 = vmatprep.subr.bf16.mxu0 0
    %407 = vmatpush1.bf16.msra.mxu0 %v386
    %408 = vmatprep.subr.bf16.mxu0 0
    %409 = vmatpush1.bf16.msra.mxu0 %v387
    %410 = vmatprep.subr.bf16.mxu0 0
    %411 = vmatpush1.bf16.msra.mxu0 %v388
    %412 = vmatprep.subr.bf16.mxu0 0
    %413 = vmatpush1.bf16.msra.mxu0 %v389
    %414 = vmatprep.subr.bf16.mxu0 0
    %415 = vmatpush1.bf16.msra.mxu0 0
    %416 = vmatprep.subr.bf16.mxu0 0
    %417 = vmatpush1.bf16.msra.mxu0 0
    %418 = vmatprep.subr.bf16.mxu0 0
    %419 = vmatpush1.bf16.msra.mxu0 0
    %420 = vmatprep.subr.bf16.mxu0 0
    %421 = vmatpush1.bf16.msra.mxu0 0
    %422 = vmatprep.subr.bf16.mxu0 0
    %423 = vmatpush1.bf16.msra.mxu0 0
    %424 = vmatprep.subr.bf16.mxu0 0
    %425 = vmatpush1.bf16.msra.mxu0 0
    %426 = vmatprep.subr.bf16.mxu0 0
    %427 = vmatpush1.bf16.msra.mxu0 0
    %428 = vmatprep.subr.bf16.mxu0 0
    %429 = vmatpush1.bf16.msra.mxu0 0
    %430 = vmatprep.mubr.bf16.mxu0 0
    %431 = vmatmul.mubr.bf16.gmra.mrb[0].mxu0 %v229
    %v432 = vpop.f32.mrb[0].mxu0
    %v433 = vadd.f32 0.0, %v432
    %v434 = vpop.f32.mrb[0].mxu0
    %v435 = vpop.f32.mrb[0].mxu0
    %v436 = vpop.f32.mrb[0].mxu0
    %437 = vdwg.mxu0
    %v438 = vld [vmem:[#allocation2 + $0xd0] sm:$0xf]
    %v439 = vld [vmem:[#allocation2 + $0xd4] sm:$0xf]
    %v440 = vld [vmem:[#allocation2 + $0xd8] sm:$0xf]
    %v441 = vld [vmem:[#allocation2 + $0xdc] sm:$0xf]
    %v442 = vld [vmem:[#allocation2 + $0xe0] sm:$0xf]
    %v443 = vld [vmem:[#allocation2 + $0xe4] sm:$0xf]
    %v444 = vld [vmem:[#allocation2 + $0xe8] sm:$0xf]
    %v445 = vld [vmem:[#allocation2 + $0xec] sm:$0xf]
    %v446 = vld [vmem:[#allocation2 + $0xf0] sm:$0xf]
    %v447 = vld [vmem:[#allocation2 + $0xf4] sm:$0xf]
    %v448 = vld [vmem:[#allocation2 + $0xf8] sm:$0xf]
    %v449 = vld [vmem:[#allocation2 + $0xfc] sm:$0xf]
    %v450 = vld [vmem:[#allocation2 + $0x100] sm:$0xf]
    %v451 = vld [vmem:[#allocation2 + $0x104] sm:$0xf]
    %v452 = vld [vmem:[#allocation2 + $0x108] sm:$0xf]
    %v453 = vld [vmem:[#allocation2 + $0x10c] sm:$0xf]
    %v470 = vunpack.c.l.b16 %v438
    %v471 = vunpack.c.l.b16 %v439
    %v472 = vunpack.c.l.b16 %v440
    %v473 = vunpack.c.l.b16 %v441
    %v474 = vunpack.c.l.b16 %v442
    %v475 = vunpack.c.l.b16 %v443
    %v476 = vunpack.c.l.b16 %v444
    %v477 = vunpack.c.l.b16 %v445
    %v478 = vunpack.c.l.b16 %v446
    %v479 = vunpack.c.l.b16 %v447
    %v480 = vunpack.c.l.b16 %v448
    %v481 = vunpack.c.l.b16 %v449
    %v482 = vunpack.c.l.b16 %v450
    %v483 = vunpack.c.l.b16 %v451
    %v484 = vunpack.c.l.b16 %v452
    %v485 = vunpack.c.l.b16 %v453
    %v486 = vpack.c.b16 %v471, %v470
    %v487 = vpack.c.b16 %v473, %v472
    %v488 = vpack.c.b16 %v475, %v474
    %v489 = vpack.c.b16 %v477, %v476
    %v490 = vpack.c.b16 %v479, %v478
    %v491 = vpack.c.b16 %v481, %v480
    %v492 = vpack.c.b16 %v483, %v482
    %v493 = vpack.c.b16 %v485, %v484
    %502 = vmatprep.subr.bf16.mxu0 0
    %503 = vmatpush1.bf16.msra.mxu0 %v486
    %504 = vmatprep.subr.bf16.mxu0 0
    %505 = vmatpush1.bf16.msra.mxu0 %v487
    %506 = vmatprep.subr.bf16.mxu0 0
    %507 = vmatpush1.bf16.msra.mxu0 %v488
    %508 = vmatprep.subr.bf16.mxu0 0
    %509 = vmatpush1.bf16.msra.mxu0 %v489
    %510 = vmatprep.subr.bf16.mxu0 0
    %511 = vmatpush1.bf16.msra.mxu0 %v490
    %512 = vmatprep.subr.bf16.mxu0 0
    %513 = vmatpush1.bf16.msra.mxu0 %v491
    %514 = vmatprep.subr.bf16.mxu0 0
    %515 = vmatpush1.bf16.msra.mxu0 %v492
    %516 = vmatprep.subr.bf16.mxu0 0
    %517 = vmatpush1.bf16.msra.mxu0 %v493
    %518 = vmatprep.subr.bf16.mxu0 0
    %519 = vmatpush1.bf16.msra.mxu0 0
    %520 = vmatprep.subr.bf16.mxu0 0
    %521 = vmatpush1.bf16.msra.mxu0 0
    %522 = vmatprep.subr.bf16.mxu0 0
    %523 = vmatpush1.bf16.msra.mxu0 0
    %524 = vmatprep.subr.bf16.mxu0 0
    %525 = vmatpush1.bf16.msra.mxu0 0
    %526 = vmatprep.subr.bf16.mxu0 0
    %527 = vmatpush1.bf16.msra.mxu0 0
    %528 = vmatprep.subr.bf16.mxu0 0
    %529 = vmatpush1.bf16.msra.mxu0 0
    %530 = vmatprep.subr.bf16.mxu0 0
    %531 = vmatpush1.bf16.msra.mxu0 0
    %532 = vmatprep.subr.bf16.mxu0 0
    %533 = vmatpush1.bf16.msra.mxu0 0
    %534 = vmatprep.mubr.bf16.mxu0 0
    %535 = vmatmul.mubr.bf16.gmra.mrb[0].mxu0 %v229
    %v536 = vpop.f32.mrb[0].mxu0
    %v537 = vadd.f32 0.0, %v536
    %v538 = vpop.f32.mrb[0].mxu0
    %v539 = vpop.f32.mrb[0].mxu0
    %v540 = vpop.f32.mrb[0].mxu0
    %541 = vdwg.mxu0
    %v542 = vld [vmem:[#allocation2 + $0x110] sm:$0xf]
    %v543 = vld [vmem:[#allocation2 + $0x114] sm:$0xf]
    %v544 = vld [vmem:[#allocation2 + $0x118] sm:$0xf]
    %v545 = vld [vmem:[#allocation2 + $0x11c] sm:$0xf]
    %v546 = vld [vmem:[#allocation2 + $0x120] sm:$0xf]
    %v547 = vld [vmem:[#allocation2 + $0x124] sm:$0xf]
    %v548 = vld [vmem:[#allocation2 + $0x128] sm:$0xf]
    %v549 = vld [vmem:[#allocation2 + $0x12c] sm:$0xf]
    %v550 = vld [vmem:[#allocation2 + $0x130] sm:$0xf]
    %v551 = vld [vmem:[#allocation2 + $0x134] sm:$0xf]
    %v552 = vld [vmem:[#allocation2 + $0x138] sm:$0xf]
    %v553 = vld [vmem:[#allocation2 + $0x13c] sm:$0xf]
    %v554 = vld [vmem:[#allocation2 + $0x140] sm:$0xf]
    %v555 = vld [vmem:[#allocation2 + $0x144] sm:$0xf]
    %v556 = vld [vmem:[#allocation2 + $0x148] sm:$0xf]
    %v557 = vld [vmem:[#allocation2 + $0x14c] sm:$0xf]
    %v574 = vunpack.c.l.b16 %v542
    %v575 = vunpack.c.l.b16 %v543
    %v576 = vunpack.c.l.b16 %v544
    %v577 = vunpack.c.l.b16 %v545
    %v578 = vunpack.c.l.b16 %v546
    %v579 = vunpack.c.l.b16 %v547
    %v580 = vunpack.c.l.b16 %v548
    %v581 = vunpack.c.l.b16 %v549
    %v582 = vunpack.c.l.b16 %v550
    %v583 = vunpack.c.l.b16 %v551
    %v584 = vunpack.c.l.b16 %v552
    %v585 = vunpack.c.l.b16 %v553
    %v586 = vunpack.c.l.b16 %v554
    %v587 = vunpack.c.l.b16 %v555
    %v588 = vunpack.c.l.b16 %v556
    %v589 = vunpack.c.l.b16 %v557
    %v590 = vpack.c.b16 %v575, %v574
    %v591 = vpack.c.b16 %v577, %v576
    %v592 = vpack.c.b16 %v579, %v578
    %v593 = vpack.c.b16 %v581, %v580
    %v594 = vpack.c.b16 %v583, %v582
    %v595 = vpack.c.b16 %v585, %v584
    %v596 = vpack.c.b16 %v587, %v586
    %v597 = vpack.c.b16 %v589, %v588
    %606 = vmatprep.subr.bf16.mxu0 0
    %607 = vmatpush1.bf16.msra.mxu0 %v590
    %608 = vmatprep.subr.bf16.mxu0 0
    %609 = vmatpush1.bf16.msra.mxu0 %v591
    %610 = vmatprep.subr.bf16.mxu0 0
    %611 = vmatpush1.bf16.msra.mxu0 %v592
    %612 = vmatprep.subr.bf16.mxu0 0
    %613 = vmatpush1.bf16.msra.mxu0 %v593
    %614 = vmatprep.subr.bf16.mxu0 0
    %615 = vmatpush1.bf16.msra.mxu0 %v594
    %616 = vmatprep.subr.bf16.mxu0 0
    %617 = vmatpush1.bf16.msra.mxu0 %v595
    %618 = vmatprep.subr.bf16.mxu0 0
    %619 = vmatpush1.bf16.msra.mxu0 %v596
    %620 = vmatprep.subr.bf16.mxu0 0
    %621 = vmatpush1.bf16.msra.mxu0 %v597
    %622 = vmatprep.subr.bf16.mxu0 0
    %623 = vmatpush1.bf16.msra.mxu0 0
    %624 = vmatprep.subr.bf16.mxu0 0
    %625 = vmatpush1.bf16.msra.mxu0 0
    %626 = vmatprep.subr.bf16.mxu0 0
    %627 = vmatpush1.bf16.msra.mxu0 0
    %628 = vmatprep.subr.bf16.mxu0 0
    %629 = vmatpush1.bf16.msra.mxu0 0
    %630 = vmatprep.subr.bf16.mxu0 0
    %631 = vmatpush1.bf16.msra.mxu0 0
    %632 = vmatprep.subr.bf16.mxu0 0
    %633 = vmatpush1.bf16.msra.mxu0 0
    %634 = vmatprep.subr.bf16.mxu0 0
    %635 = vmatpush1.bf16.msra.mxu0 0
    %636 = vmatprep.subr.bf16.mxu0 0
    %637 = vmatpush1.bf16.msra.mxu0 0
    %638 = vmatprep.mubr.bf16.mxu0 0
    %639 = vmatmul.mubr.bf16.gmra.mrb[0].mxu0 %v229
    %v640 = vpop.f32.mrb[0].mxu0
    %v641 = vadd.f32 0.0, %v640
    %v642 = vpop.f32.mrb[0].mxu0
    %v643 = vpop.f32.mrb[0].mxu0
    %v644 = vpop.f32.mrb[0].mxu0
    %645 = vdwg.mxu0
    %v647 = vrot.slane %v433, 6
    %v650 = vrot.slane %v537, 4
    %v653 = vrot.slane %v641, 2
    %vm655 = vcmask 1041408
    %v656 = vsel %vm655, %v329, %v647
    %vm657 = vcmask 1043456
    %v658 = vsel %vm657, %v656, %v650
    %vm659 = vcmask 1045504
    %v660 = vsel %vm659, %v658, %v653
    %v661 = vld [vmem:[%s2 + $0x10] sm:$0xff]
    %v662 = vadd.f32 %v660, %v661
    %v663 = vld [vmem:[%s2 + $0x18] sm:$0xff]
    %v664 = vld [vmem:[%s2 + $0x20] sm:$0xff]
    %v665 = vld [vmem:[#allocation2 + $0x150] sm:$0xf]
    %v666 = vld [vmem:[#allocation2 + $0x154] sm:$0xf]
    %v667 = vld [vmem:[#allocation2 + $0x158] sm:$0xf]
    %v668 = vld [vmem:[#allocation2 + $0x15c] sm:$0xf]
    %v669 = vld [vmem:[#allocation2 + $0x160] sm:$0xf]
    %v670 = vld [vmem:[#allocation2 + $0x164] sm:$0xf]
    %v671 = vld [vmem:[#allocation2 + $0x168] sm:$0xf]
    %v672 = vld [vmem:[#allocation2 + $0x16c] sm:$0xf]
    %v673 = vld [vmem:[#allocation2 + $0x170] sm:$0xf]
    %v674 = vpack.c.bf16 %v662, %v662
    %v684 = vunpack.c.l.b16 %v665
    %v685 = vunpack.c.l.b16 %v666
    %v686 = vunpack.c.l.b16 %v667
    %v687 = vunpack.c.l.b16 %v668
    %v688 = vunpack.c.l.b16 %v669
    %v689 = vunpack.c.l.b16 %v670
    %v690 = vunpack.c.l.b16 %v671
    %v691 = vunpack.c.l.b16 %v672
    %v692 = vunpack.c.l.b16 %v673
    %v693 = vpack.c.b16 %v685, %v684
    %v694 = vpack.c.b16 %v687, %v686
    %v695 = vpack.c.b16 %v689, %v688
    %v696 = vpack.c.b16 %v691, %v690
    %v697 = vpack.c.b16 %v692, %v692
    %vm698 = vcmask 64512
    %v700 = vsel %vm698, %v693, 0
    %v703 = vsel %vm698, %v694, 0
    %v706 = vsel %vm698, %v695, 0
    %v709 = vsel %vm698, %v696, 0
    %v712 = vsel %vm698, %v697, 0
    %v715 = vsel %vm657, %v674, 0
    %717 = vmatprep.subr.bf16.mxu0 0
    %718 = vmatpush1.bf16.msra.mxu0 %v715
    %719 = vmatprep.subr.bf16.mxu0 0
    %720 = vmatpush1.bf16.msra.mxu0 0
    %721 = vmatprep.subr.bf16.mxu0 0
    %722 = vmatpush1.bf16.msra.mxu0 0
    %723 = vmatprep.subr.bf16.mxu0 0
    %724 = vmatpush1.bf16.msra.mxu0 0
    %725 = vmatprep.subr.bf16.mxu0 0
    %726 = vmatpush1.bf16.msra.mxu0 0
    %727 = vmatprep.subr.bf16.mxu0 0
    %728 = vmatpush1.bf16.msra.mxu0 0
    %729 = vmatprep.subr.bf16.mxu0 0
    %730 = vmatpush1.bf16.msra.mxu0 0
    %731 = vmatprep.subr.bf16.mxu0 0
    %732 = vmatpush1.bf16.msra.mxu0 0
    %733 = vmatprep.subr.bf16.mxu0 0
    %734 = vmatpush1.bf16.msra.mxu0 0
    %735 = vmatprep.subr.bf16.mxu0 0
    %736 = vmatpush1.bf16.msra.mxu0 0
    %737 = vmatprep.subr.bf16.mxu0 0
    %738 = vmatpush1.bf16.msra.mxu0 0
    %739 = vmatprep.subr.bf16.mxu0 0
    %740 = vmatpush1.bf16.msra.mxu0 0
    %741 = vmatprep.subr.bf16.mxu0 0
    %742 = vmatpush1.bf16.msra.mxu0 0
    %743 = vmatprep.subr.bf16.mxu0 0
    %744 = vmatpush1.bf16.msra.mxu0 0
    %745 = vmatprep.subr.bf16.mxu0 0
    %746 = vmatpush1.bf16.msra.mxu0 0
    %747 = vmatprep.subr.bf16.mxu0 0
    %748 = vmatpush1.bf16.msra.mxu0 0
    %749 = vmatprep.mubr.bf16.mxu0 0
    %750 = vmatmul.mubr.bf16.gmra.mrb[0].mxu0 %v700
    %v751 = vpop.f32.mrb[0].mxu0
    %v752 = vadd.f32 0.0, %v751
    %v753 = vpop.f32.mrb[0].mxu0
    %v754 = vpop.f32.mrb[0].mxu0
    %v755 = vadd.f32 0.0, %v754
    %v756 = vpop.f32.mrb[0].mxu0
    %757 = vmatprep.mubr.bf16.mxu0 0
    %758 = vmatmul.mubr.bf16.gmra.mrb[0].mxu0 %v703
    %v759 = vpop.f32.mrb[0].mxu0
    %v760 = vadd.f32 0.0, %v759
    %v761 = vpop.f32.mrb[0].mxu0
    %v762 = vpop.f32.mrb[0].mxu0
    %v763 = vadd.f32 0.0, %v762
    %v764 = vpop.f32.mrb[0].mxu0
    %765 = vmatprep.mubr.bf16.mxu0 0
    %766 = vmatmul.mubr.bf16.gmra.mrb[0].mxu0 %v706
    %v767 = vpop.f32.mrb[0].mxu0
    %v768 = vadd.f32 0.0, %v767
    %v769 = vpop.f32.mrb[0].mxu0
    %v770 = vpop.f32.mrb[0].mxu0
    %v771 = vadd.f32 0.0, %v770
    %v772 = vpop.f32.mrb[0].mxu0
    %773 = vmatprep.mubr.bf16.mxu0 0
    %774 = vmatmul.mubr.bf16.gmra.mrb[0].mxu0 %v709
    %v775 = vpop.f32.mrb[0].mxu0
    %v776 = vadd.f32 0.0, %v775
    %v777 = vpop.f32.mrb[0].mxu0
    %v778 = vpop.f32.mrb[0].mxu0
    %v779 = vadd.f32 0.0, %v778
    %v780 = vpop.f32.mrb[0].mxu0
    %781 = vmatprep.mubr.bf16.mxu0 0
    %782 = vmatmul.mubr.bf16.gmra.mrb[0].mxu0 %v712
    %v783 = vpop.f32.mrb[0].mxu0
    %v784 = vadd.f32 0.0, %v783
    %v785 = vpop.f32.mrb[0].mxu0
    %v786 = vpop.f32.mrb[0].mxu0
    %v787 = vpop.f32.mrb[0].mxu0
    %788 = vdwg.mxu0
    %v789 = vpack.c.bf16 %v752, %v752
    %v790 = vld [vmem:[%s3] sm:$0xf]
    %v791 = vld [vmem:[%s3 + $0x4] sm:$0xf]
    %v792 = vpack.c.bf16 %v755, %v755
    %v793 = vld [vmem:[%s3 + $0x8] sm:$0xf]
    %v794 = vld [vmem:[%s3 + $0xc] sm:$0xf]
    %v797 = vunpack.c.l.b16 %v793
    %v798 = vunpack.c.l.b16 %v794
    %v799 = vpack.c.b16 %v798, %v797
    %vm801 = vcmask 130048
    %v803 = vsel %vm801, %v792, 0
    %805 = vmatprep.subr.bf16.mxu0 0
    %806 = vmatpush1.bf16.msra.mxu0 %v799
    %807 = vmatprep.subr.bf16.mxu0 0
    %808 = vmatpush1.bf16.msra.mxu0 0
    %809 = vmatprep.subr.bf16.mxu0 0
    %810 = vmatpush1.bf16.msra.mxu0 0
    %811 = vmatprep.subr.bf16.mxu0 0
    %812 = vmatpush1.bf16.msra.mxu0 0
    %813 = vmatprep.subr.bf16.mxu0 0
    %814 = vmatpush1.bf16.msra.mxu0 0
    %815 = vmatprep.subr.bf16.mxu0 0
    %816 = vmatpush1.bf16.msra.mxu0 0
    %817 = vmatprep.subr.bf16.mxu0 0
    %818 = vmatpush1.bf16.msra.mxu0 0
    %819 = vmatprep.subr.bf16.mxu0 0
    %820 = vmatpush1.bf16.msra.mxu0 0
    %821 = vmatprep.subr.bf16.mxu0 0
    %822 = vmatpush1.bf16.msra.mxu0 0
    %823 = vmatprep.subr.bf16.mxu0 0
    %824 = vmatpush1.bf16.msra.mxu0 0
    %825 = vmatprep.subr.bf16.mxu0 0
    %826 = vmatpush1.bf16.msra.mxu0 0
    %827 = vmatprep.subr.bf16.mxu0 0
    %828 = vmatpush1.bf16.msra.mxu0 0
    %829 = vmatprep.subr.bf16.mxu0 0
    %830 = vmatpush1.bf16.msra.mxu0 0
    %831 = vmatprep.subr.bf16.mxu0 0
    %832 = vmatpush1.bf16.msra.mxu0 0
    %833 = vmatprep.subr.bf16.mxu0 0
    %834 = vmatpush1.bf16.msra.mxu0 0
    %835 = vmatprep.subr.bf16.mxu0 0
    %836 = vmatpush1.bf16.msra.mxu0 0
    %837 = vmatprep.mubr.bf16.mxu0 0
    %838 = vmatmul.mubr.bf16.gmra.mrb[0].mxu0 %v803
    %v839 = vpop.f32.mrb[0].mxu0
    %v840 = vadd.f32 0.0, %v839
    %v841 = vpop.f32.mrb[0].mxu0
    %v842 = vpop.f32.mrb[0].mxu0
    %v843 = vpop.f32.mrb[0].mxu0
    %844 = vdwg.mxu0
    %v847 = vunpack.c.l.b16 %v790
    %v848 = vunpack.c.l.b16 %v791
    %v849 = vpack.c.b16 %v848, %v847
    %v852 = vsel %vm801, %v789, 0
    %854 = vmatprep.subr.bf16.mxu0 0
    %855 = vmatpush1.bf16.msra.mxu0 %v849
    %856 = vmatprep.subr.bf16.mxu0 0
    %857 = vmatpush1.bf16.msra.mxu0 0
    %858 = vmatprep.subr.bf16.mxu0 0
    %859 = vmatpush1.bf16.msra.mxu0 0
    %860 = vmatprep.subr.bf16.mxu0 0
    %861 = vmatpush1.bf16.msra.mxu0 0
    %862 = vmatprep.subr.bf16.mxu0 0
    %863 = vmatpush1.bf16.msra.mxu0 0
    %864 = vmatprep.subr.bf16.mxu0 0
    %865 = vmatpush1.bf16.msra.mxu0 0
    %866 = vmatprep.subr.bf16.mxu0 0
    %867 = vmatpush1.bf16.msra.mxu0 0
    %868 = vmatprep.subr.bf16.mxu0 0
    %869 = vmatpush1.bf16.msra.mxu0 0
    %870 = vmatprep.subr.bf16.mxu0 0
    %871 = vmatpush1.bf16.msra.mxu0 0
    %872 = vmatprep.subr.bf16.mxu0 0
    %873 = vmatpush1.bf16.msra.mxu0 0
    %874 = vmatprep.subr.bf16.mxu0 0
    %875 = vmatpush1.bf16.msra.mxu0 0
    %876 = vmatprep.subr.bf16.mxu0 0
    %877 = vmatpush1.bf16.msra.mxu0 0
    %878 = vmatprep.subr.bf16.mxu0 0
    %879 = vmatpush1.bf16.msra.mxu0 0
    %880 = vmatprep.subr.bf16.mxu0 0
    %881 = vmatpush1.bf16.msra.mxu0 0
    %882 = vmatprep.subr.bf16.mxu0 0
    %883 = vmatpush1.bf16.msra.mxu0 0
    %884 = vmatprep.subr.bf16.mxu0 0
    %885 = vmatpush1.bf16.msra.mxu0 0
    %886 = vmatprep.mubr.bf16.mxu0 0
    %887 = vmatmul.mubr.bf16.gmra.mrb[0].mxu0 %v852
    %v888 = vpop.f32.mrb[0].mxu0
    %v889 = vadd.f32 %v840, %v888
    %v890 = vpop.f32.mrb[0].mxu0
    %v891 = vpop.f32.mrb[0].mxu0
    %v892 = vpop.f32.mrb[0].mxu0
    %893 = vdwg.mxu0
    %v894 = vpack.c.bf16 %v760, %v760
    %v895 = vld [vmem:[%s3 + $0x10] sm:$0xf]
    %v896 = vld [vmem:[%s3 + $0x14] sm:$0xf]
    %v899 = vunpack.c.l.b16 %v895
    %v900 = vunpack.c.l.b16 %v896
    %v901 = vpack.c.b16 %v900, %v899
    %v904 = vsel %vm801, %v894, 0
    %906 = vmatprep.subr.bf16.mxu0 0
    %907 = vmatpush1.bf16.msra.mxu0 %v901
    %908 = vmatprep.subr.bf16.mxu0 0
    %909 = vmatpush1.bf16.msra.mxu0 0
    %910 = vmatprep.subr.bf16.mxu0 0
    %911 = vmatpush1.bf16.msra.mxu0 0
    %912 = vmatprep.subr.bf16.mxu0 0
    %913 = vmatpush1.bf16.msra.mxu0 0
    %914 = vmatprep.subr.bf16.mxu0 0
    %915 = vmatpush1.bf16.msra.mxu0 0
    %916 = vmatprep.subr.bf16.mxu0 0
    %917 = vmatpush1.bf16.msra.mxu0 0
    %918 = vmatprep.subr.bf16.mxu0 0
    %919 = vmatpush1.bf16.msra.mxu0 0
    %920 = vmatprep.subr.bf16.mxu0 0
    %921 = vmatpush1.bf16.msra.mxu0 0
    %922 = vmatprep.subr.bf16.mxu0 0
    %923 = vmatpush1.bf16.msra.mxu0 0
    %924 = vmatprep.subr.bf16.mxu0 0
    %925 = vmatpush1.bf16.msra.mxu0 0
    %926 = vmatprep.subr.bf16.mxu0 0
    %927 = vmatpush1.bf16.msra.mxu0 0
    %928 = vmatprep.subr.bf16.mxu0 0
    %929 = vmatpush1.bf16.msra.mxu0 0
    %930 = vmatprep.subr.bf16.mxu0 0
    %931 = vmatpush1.bf16.msra.mxu0 0
    %932 = vmatprep.subr.bf16.mxu0 0
    %933 = vmatpush1.bf16.msra.mxu0 0
    %934 = vmatprep.subr.bf16.mxu0 0
    %935 = vmatpush1.bf16.msra.mxu0 0
    %936 = vmatprep.subr.bf16.mxu0 0
    %937 = vmatpush1.bf16.msra.mxu0 0
    %938 = vmatprep.mubr.bf16.mxu0 0
    %939 = vmatmul.mubr.bf16.gmra.mrb[0].mxu0 %v904
    %v940 = vpop.f32.mrb[0].mxu0
    %v941 = vadd.f32 0.0, %v940
    %v942 = vpop.f32.mrb[0].mxu0
    %v943 = vpop.f32.mrb[0].mxu0
    %v944 = vpop.f32.mrb[0].mxu0
    %945 = vdwg.mxu0
    %v946 = vadd.f32 %v889, %v941
    %v947 = vpack.c.bf16 %v763, %v763
    %v948 = vld [vmem:[%s3 + $0x18] sm:$0xf]
    %v949 = vld [vmem:[%s3 + $0x1c] sm:$0xf]
    %v952 = vunpack.c.l.b16 %v948
    %v953 = vunpack.c.l.b16 %v949
    %v954 = vpack.c.b16 %v953, %v952
    %v957 = vsel %vm801, %v947, 0
    %959 = vmatprep.subr.bf16.mxu0 0
    %960 = vmatpush1.bf16.msra.mxu0 %v954
    %961 = vmatprep.subr.bf16.mxu0 0
    %962 = vmatpush1.bf16.msra.mxu0 0
    %963 = vmatprep.subr.bf16.mxu0 0
    %964 = vmatpush1.bf16.msra.mxu0 0
    %965 = vmatprep.subr.bf16.mxu0 0
    %966 = vmatpush1.bf16.msra.mxu0 0
    %967 = vmatprep.subr.bf16.mxu0 0
    %968 = vmatpush1.bf16.msra.mxu0 0
    %969 = vmatprep.subr.bf16.mxu0 0
    %970 = vmatpush1.bf16.msra.mxu0 0
    %971 = vmatprep.subr.bf16.mxu0 0
    %972 = vmatpush1.bf16.msra.mxu0 0
    %973 = vmatprep.subr.bf16.mxu0 0
    %974 = vmatpush1.bf16.msra.mxu0 0
    %975 = vmatprep.subr.bf16.mxu0 0
    %976 = vmatpush1.bf16.msra.mxu0 0
    %977 = vmatprep.subr.bf16.mxu0 0
    %978 = vmatpush1.bf16.msra.mxu0 0
    %979 = vmatprep.subr.bf16.mxu0 0
    %980 = vmatpush1.bf16.msra.mxu0 0
    %981 = vmatprep.subr.bf16.mxu0 0
    %982 = vmatpush1.bf16.msra.mxu0 0
    %983 = vmatprep.subr.bf16.mxu0 0
    %984 = vmatpush1.bf16.msra.mxu0 0
    %985 = vmatprep.subr.bf16.mxu0 0
    %986 = vmatpush1.bf16.msra.mxu0 0
    %987 = vmatprep.subr.bf16.mxu0 0
    %988 = vmatpush1.bf16.msra.mxu0 0
    %989 = vmatprep.subr.bf16.mxu0 0
    %990 = vmatpush1.bf16.msra.mxu0 0
    %991 = vmatprep.mubr.bf16.mxu0 0
    %992 = vmatmul.mubr.bf16.gmra.mrb[0].mxu0 %v957
    %v993 = vpop.f32.mrb[0].mxu0
    %v994 = vadd.f32 0.0, %v993
    %v995 = vpop.f32.mrb[0].mxu0
    %v996 = vpop.f32.mrb[0].mxu0
    %v997 = vpop.f32.mrb[0].mxu0
    %998 = vdwg.mxu0
    %v999 = vadd.f32 %v946, %v994
    %v1000 = vpack.c.bf16 %v768, %v768
    %v1001 = vld [vmem:[%s3 + $0x20] sm:$0xf]
    %v1002 = vld [vmem:[%s3 + $0x24] sm:$0xf]
    %v1005 = vunpack.c.l.b16 %v1001
    %v1006 = vunpack.c.l.b16 %v1002
    %v1007 = vpack.c.b16 %v1006, %v1005
    %v1010 = vsel %vm801, %v1000, 0
    %1012 = vmatprep.subr.bf16.mxu0 0
    %1013 = vmatpush1.bf16.msra.mxu0 %v1007
    %1014 = vmatprep.subr.bf16.mxu0 0
    %1015 = vmatpush1.bf16.msra.mxu0 0
    %1016 = vmatprep.subr.bf16.mxu0 0
    %1017 = vmatpush1.bf16.msra.mxu0 0
    %1018 = vmatprep.subr.bf16.mxu0 0
    %1019 = vmatpush1.bf16.msra.mxu0 0
    %1020 = vmatprep.subr.bf16.mxu0 0
    %1021 = vmatpush1.bf16.msra.mxu0 0
    %1022 = vmatprep.subr.bf16.mxu0 0
    %1023 = vmatpush1.bf16.msra.mxu0 0
    %1024 = vmatprep.subr.bf16.mxu0 0
    %1025 = vmatpush1.bf16.msra.mxu0 0
    %1026 = vmatprep.subr.bf16.mxu0 0
    %1027 = vmatpush1.bf16.msra.mxu0 0
    %1028 = vmatprep.subr.bf16.mxu0 0
    %1029 = vmatpush1.bf16.msra.mxu0 0
    %1030 = vmatprep.subr.bf16.mxu0 0
    %1031 = vmatpush1.bf16.msra.mxu0 0
    %1032 = vmatprep.subr.bf16.mxu0 0
    %1033 = vmatpush1.bf16.msra.mxu0 0
    %1034 = vmatprep.subr.bf16.mxu0 0
    %1035 = vmatpush1.bf16.msra.mxu0 0
    %1036 = vmatprep.subr.bf16.mxu0 0
    %1037 = vmatpush1.bf16.msra.mxu0 0
    %1038 = vmatprep.subr.bf16.mxu0 0
    %1039 = vmatpush1.bf16.msra.mxu0 0
    %1040 = vmatprep.subr.bf16.mxu0 0
    %1041 = vmatpush1.bf16.msra.mxu0 0
    %1042 = vmatprep.subr.bf16.mxu0 0
    %1043 = vmatpush1.bf16.msra.mxu0 0
    %1044 = vmatprep.mubr.bf16.mxu0 0
    %1045 = vmatmul.mubr.bf16.gmra.mrb[0].mxu0 %v1010
    %v1046 = vpop.f32.mrb[0].mxu0
    %v1047 = vadd.f32 0.0, %v1046
    %v1048 = vpop.f32.mrb[0].mxu0
    %v1049 = vpop.f32.mrb[0].mxu0
    %v1050 = vpop.f32.mrb[0].mxu0
    %1051 = vdwg.mxu0
    %v1052 = vadd.f32 %v999, %v1047
    %v1053 = vpack.c.bf16 %v771, %v771
    %v1054 = vld [vmem:[%s3 + $0x28] sm:$0xf]
    %v1055 = vld [vmem:[%s3 + $0x2c] sm:$0xf]
    %v1058 = vunpack.c.l.b16 %v1054
    %v1059 = vunpack.c.l.b16 %v1055
    %v1060 = vpack.c.b16 %v1059, %v1058
    %v1063 = vsel %vm801, %v1053, 0
    %1065 = vmatprep.subr.bf16.mxu0 0
    %1066 = vmatpush1.bf16.msra.mxu0 %v1060
    %1067 = vmatprep.subr.bf16.mxu0 0
    %1068 = vmatpush1.bf16.msra.mxu0 0
    %1069 = vmatprep.subr.bf16.mxu0 0
    %1070 = vmatpush1.bf16.msra.mxu0 0
    %1071 = vmatprep.subr.bf16.mxu0 0
    %1072 = vmatpush1.bf16.msra.mxu0 0
    %1073 = vmatprep.subr.bf16.mxu0 0
    %1074 = vmatpush1.bf16.msra.mxu0 0
    %1075 = vmatprep.subr.bf16.mxu0 0
    %1076 = vmatpush1.bf16.msra.mxu0 0
    %1077 = vmatprep.subr.bf16.mxu0 0
    %1078 = vmatpush1.bf16.msra.mxu0 0
    %1079 = vmatprep.subr.bf16.mxu0 0
    %1080 = vmatpush1.bf16.msra.mxu0 0
    %1081 = vmatprep.subr.bf16.mxu0 0
    %1082 = vmatpush1.bf16.msra.mxu0 0
    %1083 = vmatprep.subr.bf16.mxu0 0
    %1084 = vmatpush1.bf16.msra.mxu0 0
    %1085 = vmatprep.subr.bf16.mxu0 0
    %1086 = vmatpush1.bf16.msra.mxu0 0
    %1087 = vmatprep.subr.bf16.mxu0 0
    %1088 = vmatpush1.bf16.msra.mxu0 0
    %1089 = vmatprep.subr.bf16.mxu0 0
    %1090 = vmatpush1.bf16.msra.mxu0 0
    %1091 = vmatprep.subr.bf16.mxu0 0
    %1092 = vmatpush1.bf16.msra.mxu0 0
    %1093 = vmatprep.subr.bf16.mxu0 0
    %1094 = vmatpush1.bf16.msra.mxu0 0
    %1095 = vmatprep.subr.bf16.mxu0 0
    %1096 = vmatpush1.bf16.msra.mxu0 0
    %1097 = vmatprep.mubr.bf16.mxu0 0
    %1098 = vmatmul.mubr.bf16.gmra.mrb[0].mxu0 %v1063
    %v1099 = vpop.f32.mrb[0].mxu0
    %v1100 = vadd.f32 0.0, %v1099
    %v1101 = vpop.f32.mrb[0].mxu0
    %v1102 = vpop.f32.mrb[0].mxu0
    %v1103 = vpop.f32.mrb[0].mxu0
    %1104 = vdwg.mxu0
    %v1105 = vadd.f32 %v1052, %v1100
    %v1106 = vpack.c.bf16 %v776, %v776
    %v1107 = vld [vmem:[%s3 + $0x30] sm:$0xf]
    %v1108 = vld [vmem:[%s3 + $0x34] sm:$0xf]
    %v1111 = vunpack.c.l.b16 %v1107
    %v1112 = vunpack.c.l.b16 %v1108
    %v1113 = vpack.c.b16 %v1112, %v1111
    %v1116 = vsel %vm801, %v1106, 0
    %1118 = vmatprep.subr.bf16.mxu0 0
    %1119 = vmatpush1.bf16.msra.mxu0 %v1113
    %1120 = vmatprep.subr.bf16.mxu0 0
    %1121 = vmatpush1.bf16.msra.mxu0 0
    %1122 = vmatprep.subr.bf16.mxu0 0
    %1123 = vmatpush1.bf16.msra.mxu0 0
    %1124 = vmatprep.subr.bf16.mxu0 0
    %1125 = vmatpush1.bf16.msra.mxu0 0
    %1126 = vmatprep.subr.bf16.mxu0 0
    %1127 = vmatpush1.bf16.msra.mxu0 0
    %1128 = vmatprep.subr.bf16.mxu0 0
    %1129 = vmatpush1.bf16.msra.mxu0 0
    %1130 = vmatprep.subr.bf16.mxu0 0
    %1131 = vmatpush1.bf16.msra.mxu0 0
    %1132 = vmatprep.subr.bf16.mxu0 0
    %1133 = vmatpush1.bf16.msra.mxu0 0
    %1134 = vmatprep.subr.bf16.mxu0 0
    %1135 = vmatpush1.bf16.msra.mxu0 0
    %1136 = vmatprep.subr.bf16.mxu0 0
    %1137 = vmatpush1.bf16.msra.mxu0 0
    %1138 = vmatprep.subr.bf16.mxu0 0
    %1139 = vmatpush1.bf16.msra.mxu0 0
    %1140 = vmatprep.subr.bf16.mxu0 0
    %1141 = vmatpush1.bf16.msra.mxu0 0
    %1142 = vmatprep.subr.bf16.mxu0 0
    %1143 = vmatpush1.bf16.msra.mxu0 0
    %1144 = vmatprep.subr.bf16.mxu0 0
    %1145 = vmatpush1.bf16.msra.mxu0 0
    %1146 = vmatprep.subr.bf16.mxu0 0
    %1147 = vmatpush1.bf16.msra.mxu0 0
    %1148 = vmatprep.subr.bf16.mxu0 0
    %1149 = vmatpush1.bf16.msra.mxu0 0
    %1150 = vmatprep.mubr.bf16.mxu0 0
    %1151 = vmatmul.mubr.bf16.gmra.mrb[0].mxu0 %v1116
    %v1152 = vpop.f32.mrb[0].mxu0
    %v1153 = vadd.f32 0.0, %v1152
    %v1154 = vpop.f32.mrb[0].mxu0
    %v1155 = vpop.f32.mrb[0].mxu0
    %v1156 = vpop.f32.mrb[0].mxu0
    %1157 = vdwg.mxu0
    %v1158 = vadd.f32 %v1105, %v1153
    %v1159 = vpack.c.bf16 %v779, %v779
    %v1160 = vld [vmem:[%s3 + $0x38] sm:$0xf]
    %v1161 = vld [vmem:[%s3 + $0x3c] sm:$0xf]
    %v1164 = vunpack.c.l.b16 %v1160
    %v1165 = vunpack.c.l.b16 %v1161
    %v1166 = vpack.c.b16 %v1165, %v1164
    %v1169 = vsel %vm801, %v1159, 0
    %1171 = vmatprep.subr.bf16.mxu0 0
    %1172 = vmatpush1.bf16.msra.mxu0 %v1166
    %1173 = vmatprep.subr.bf16.mxu0 0
    %1174 = vmatpush1.bf16.msra.mxu0 0
    %1175 = vmatprep.subr.bf16.mxu0 0
    %1176 = vmatpush1.bf16.msra.mxu0 0
    %1177 = vmatprep.subr.bf16.mxu0 0
    %1178 = vmatpush1.bf16.msra.mxu0 0
    %1179 = vmatprep.subr.bf16.mxu0 0
    %1180 = vmatpush1.bf16.msra.mxu0 0
    %1181 = vmatprep.subr.bf16.mxu0 0
    %1182 = vmatpush1.bf16.msra.mxu0 0
    %1183 = vmatprep.subr.bf16.mxu0 0
    %1184 = vmatpush1.bf16.msra.mxu0 0
    %1185 = vmatprep.subr.bf16.mxu0 0
    %1186 = vmatpush1.bf16.msra.mxu0 0
    %1187 = vmatprep.subr.bf16.mxu0 0
    %1188 = vmatpush1.bf16.msra.mxu0 0
    %1189 = vmatprep.subr.bf16.mxu0 0
    %1190 = vmatpush1.bf16.msra.mxu0 0
    %1191 = vmatprep.subr.bf16.mxu0 0
    %1192 = vmatpush1.bf16.msra.mxu0 0
    %1193 = vmatprep.subr.bf16.mxu0 0
    %1194 = vmatpush1.bf16.msra.mxu0 0
    %1195 = vmatprep.subr.bf16.mxu0 0
    %1196 = vmatpush1.bf16.msra.mxu0 0
    %1197 = vmatprep.subr.bf16.mxu0 0
    %1198 = vmatpush1.bf16.msra.mxu0 0
    %1199 = vmatprep.subr.bf16.mxu0 0
    %1200 = vmatpush1.bf16.msra.mxu0 0
    %1201 = vmatprep.subr.bf16.mxu0 0
    %1202 = vmatpush1.bf16.msra.mxu0 0
    %1203 = vmatprep.mubr.bf16.mxu0 0
    %1204 = vmatmul.mubr.bf16.gmra.mrb[0].mxu0 %v1169
    %v1205 = vpop.f32.mrb[0].mxu0
    %v1206 = vadd.f32 0.0, %v1205
    %v1207 = vpop.f32.mrb[0].mxu0
    %v1208 = vpop.f32.mrb[0].mxu0
    %v1209 = vpop.f32.mrb[0].mxu0
    %1210 = vdwg.mxu0
    %v1211 = vadd.f32 %v1158, %v1206
    %v1212 = vpack.c.bf16 %v784, %v784
    %v1213 = vld [vmem:[%s3 + $0x40] sm:$0xf]
    %v1214 = vld [vmem:[%s3 + $0x44] sm:$0xf]
    %v1217 = vunpack.c.l.b16 %v1213
    %v1218 = vunpack.c.l.b16 %v1214
    %v1219 = vpack.c.b16 %v1218, %v1217
    %v1222 = vsel %vm801, %v1212, 0
    %1224 = vmatprep.subr.bf16.mxu0 0
    %1225 = vmatpush1.bf16.msra.mxu0 %v1219
    %1226 = vmatprep.subr.bf16.mxu0 0
    %1227 = vmatpush1.bf16.msra.mxu0 0
    %1228 = vmatprep.subr.bf16.mxu0 0
    %1229 = vmatpush1.bf16.msra.mxu0 0
    %1230 = vmatprep.subr.bf16.mxu0 0
    %1231 = vmatpush1.bf16.msra.mxu0 0
    %1232 = vmatprep.subr.bf16.mxu0 0
    %1233 = vmatpush1.bf16.msra.mxu0 0
    %1234 = vmatprep.subr.bf16.mxu0 0
    %1235 = vmatpush1.bf16.msra.mxu0 0
    %1236 = vmatprep.subr.bf16.mxu0 0
    %1237 = vmatpush1.bf16.msra.mxu0 0
    %1238 = vmatprep.subr.bf16.mxu0 0
    %1239 = vmatpush1.bf16.msra.mxu0 0
    %1240 = vmatprep.subr.bf16.mxu0 0
    %1241 = vmatpush1.bf16.msra.mxu0 0
    %1242 = vmatprep.subr.bf16.mxu0 0
    %1243 = vmatpush1.bf16.msra.mxu0 0
    %1244 = vmatprep.subr.bf16.mxu0 0
    %1245 = vmatpush1.bf16.msra.mxu0 0
    %1246 = vmatprep.subr.bf16.mxu0 0
    %1247 = vmatpush1.bf16.msra.mxu0 0
    %1248 = vmatprep.subr.bf16.mxu0 0
    %1249 = vmatpush1.bf16.msra.mxu0 0
    %1250 = vmatprep.subr.bf16.mxu0 0
    %1251 = vmatpush1.bf16.msra.mxu0 0
    %1252 = vmatprep.subr.bf16.mxu0 0
    %1253 = vmatpush1.bf16.msra.mxu0 0
    %1254 = vmatprep.subr.bf16.mxu0 0
    %1255 = vmatpush1.bf16.msra.mxu0 0
    %1256 = vmatprep.mubr.bf16.mxu0 0
    %1257 = vmatmul.mubr.bf16.gmra.mrb[0].mxu0 %v1222
    %v1258 = vpop.f32.mrb[0].mxu0
    %v1259 = vadd.f32 0.0, %v1258
    %v1260 = vpop.f32.mrb[0].mxu0
    %v1261 = vpop.f32.mrb[0].mxu0
    %v1262 = vpop.f32.mrb[0].mxu0
    %1263 = vdwg.mxu0
    %v1264 = vadd.f32 %v1211, %v1259
    %1266 = vset.pattern.permute.xlu0 0
    %1267 = vperm.xlu0 %1266, %v663
    %v1268 = vpop.permute.xlu0 %1267
    %v1270 = vadd.f32 %v1264, %v1268
    %v1271 = vmax.f32 %v1270, 0.0
    %v1272 = vld [vmem:[#allocation2 + $0x178] sm:$0xf]
    %v1273 = vld [vmem:[#allocation2 + $0x17c] sm:$0xf]
    %v1274 = vld [vmem:[#allocation2 + $0x180] sm:$0xf]
    %v1275 = vld [vmem:[#allocation2 + $0x184] sm:$0xf]
    %v1276 = vld [vmem:[#allocation2 + $0x188] sm:$0xf]
    %v1277 = vld [vmem:[#allocation2 + $0x18c] sm:$0xf]
    %v1278 = vld [vmem:[#allocation2 + $0x190] sm:$0xf]
    %v1279 = vld [vmem:[#allocation2 + $0x194] sm:$0xf]
    %v1280 = vld [vmem:[#allocation2 + $0x198] sm:$0xf]
    %v1281 = vpack.c.bf16 %v1271, %v1271
    %v1291 = vunpack.c.l.b16 %v1272
    %v1292 = vunpack.c.l.b16 %v1273
    %v1293 = vunpack.c.l.b16 %v1274
    %v1294 = vunpack.c.l.b16 %v1275
    %v1295 = vunpack.c.l.b16 %v1276
    %v1296 = vunpack.c.l.b16 %v1277
    %v1297 = vunpack.c.l.b16 %v1278
    %v1298 = vunpack.c.l.b16 %v1279
    %v1299 = vunpack.c.l.b16 %v1280
    %v1300 = vpack.c.b16 %v1292, %v1291
    %v1301 = vpack.c.b16 %v1294, %v1293
    %v1302 = vpack.c.b16 %v1296, %v1295
    %v1303 = vpack.c.b16 %v1298, %v1297
    %v1304 = vpack.c.b16 %v1299, %v1299
    %v1306 = vsel %vm698, %v1300, 0
    %v1309 = vsel %vm698, %v1301, 0
    %v1312 = vsel %vm698, %v1302, 0
    %v1315 = vsel %vm698, %v1303, 0
    %v1318 = vsel %vm698, %v1304, 0
    %v1321 = vsel %vm657, %v1281, 0
    %1323 = vmatprep.subr.bf16.mxu0 0
    %1324 = vmatpush1.bf16.msra.mxu0 %v1321
    %1325 = vmatprep.subr.bf16.mxu0 0
    %1326 = vmatpush1.bf16.msra.mxu0 0
    %1327 = vmatprep.subr.bf16.mxu0 0
    %1328 = vmatpush1.bf16.msra.mxu0 0
    %1329 = vmatprep.subr.bf16.mxu0 0
    %1330 = vmatpush1.bf16.msra.mxu0 0
    %1331 = vmatprep.subr.bf16.mxu0 0
    %1332 = vmatpush1.bf16.msra.mxu0 0
    %1333 = vmatprep.subr.bf16.mxu0 0
    %1334 = vmatpush1.bf16.msra.mxu0 0
    %1335 = vmatprep.subr.bf16.mxu0 0
    %1336 = vmatpush1.bf16.msra.mxu0 0
    %1337 = vmatprep.subr.bf16.mxu0 0
    %1338 = vmatpush1.bf16.msra.mxu0 0
    %1339 = vmatprep.subr.bf16.mxu0 0
    %1340 = vmatpush1.bf16.msra.mxu0 0
    %1341 = vmatprep.subr.bf16.mxu0 0
    %1342 = vmatpush1.bf16.msra.mxu0 0
    %1343 = vmatprep.subr.bf16.mxu0 0
    %1344 = vmatpush1.bf16.msra.mxu0 0
    %1345 = vmatprep.subr.bf16.mxu0 0
    %1346 = vmatpush1.bf16.msra.mxu0 0
    %1347 = vmatprep.subr.bf16.mxu0 0
    %1348 = vmatpush1.bf16.msra.mxu0 0
    %1349 = vmatprep.subr.bf16.mxu0 0
    %1350 = vmatpush1.bf16.msra.mxu0 0
    %1351 = vmatprep.subr.bf16.mxu0 0
    %1352 = vmatpush1.bf16.msra.mxu0 0
    %1353 = vmatprep.subr.bf16.mxu0 0
    %1354 = vmatpush1.bf16.msra.mxu0 0
    %1355 = vmatprep.mubr.bf16.mxu0 0
    %1356 = vmatmul.mubr.bf16.gmra.mrb[0].mxu0 %v1306
    %v1357 = vpop.f32.mrb[0].mxu0
    %v1358 = vadd.f32 0.0, %v1357
    %v1359 = vpop.f32.mrb[0].mxu0
    %v1360 = vpop.f32.mrb[0].mxu0
    %v1361 = vadd.f32 0.0, %v1360
    %v1362 = vpop.f32.mrb[0].mxu0
    %1363 = vmatprep.mubr.bf16.mxu0 0
    %1364 = vmatmul.mubr.bf16.gmra.mrb[0].mxu0 %v1309
    %v1365 = vpop.f32.mrb[0].mxu0
    %v1366 = vadd.f32 0.0, %v1365
    %v1367 = vpop.f32.mrb[0].mxu0
    %v1368 = vpop.f32.mrb[0].mxu0
    %v1369 = vadd.f32 0.0, %v1368
    %v1370 = vpop.f32.mrb[0].mxu0
    %1371 = vmatprep.mubr.bf16.mxu0 0
    %1372 = vmatmul.mubr.bf16.gmra.mrb[0].mxu0 %v1312
    %v1373 = vpop.f32.mrb[0].mxu0
    %v1374 = vadd.f32 0.0, %v1373
    %v1375 = vpop.f32.mrb[0].mxu0
    %v1376 = vpop.f32.mrb[0].mxu0
    %v1377 = vadd.f32 0.0, %v1376
    %v1378 = vpop.f32.mrb[0].mxu0
    %1379 = vmatprep.mubr.bf16.mxu0 0
    %1380 = vmatmul.mubr.bf16.gmra.mrb[0].mxu0 %v1315
    %v1381 = vpop.f32.mrb[0].mxu0
    %v1382 = vadd.f32 0.0, %v1381
    %v1383 = vpop.f32.mrb[0].mxu0
    %v1384 = vpop.f32.mrb[0].mxu0
    %v1385 = vadd.f32 0.0, %v1384
    %v1386 = vpop.f32.mrb[0].mxu0
    %1387 = vmatprep.mubr.bf16.mxu0 0
    %1388 = vmatmul.mubr.bf16.gmra.mrb[0].mxu0 %v1318
    %v1389 = vpop.f32.mrb[0].mxu0
    %v1390 = vadd.f32 0.0, %v1389
    %v1391 = vpop.f32.mrb[0].mxu0
    %v1392 = vpop.f32.mrb[0].mxu0
    %v1393 = vpop.f32.mrb[0].mxu0
    %1394 = vdwg.mxu0
    %v1395 = vpack.c.bf16 %v1358, %v1358
    %v1396 = vld [vmem:[#allocation5] sm:$0xff]
    %v1397 = vld [vmem:[#allocation5 + $0x8] sm:$0xff]
    %v1398 = vld [vmem:[#allocation5 + $0x10] sm:$0xff]
    %v1399 = vld [vmem:[#allocation5 + $0x18] sm:$0xff]
    %v1400 = vld [vmem:[#allocation5 + $0x20] sm:$0xff]
    %v1401 = vld [vmem:[#allocation5 + $0x28] sm:$0xff]
    %v1402 = vld [vmem:[#allocation5 + $0x30] sm:$0xff]
    %v1403 = vld [vmem:[#allocation5 + $0x38] sm:$0xff]
    %v1404 = vpack.c.bf16 %v1361, %v1361
    %v1405 = vld [vmem:[#allocation5 + $0x40] sm:$0xff]
    %v1406 = vld [vmem:[#allocation5 + $0x48] sm:$0xff]
    %v1407 = vld [vmem:[#allocation5 + $0x50] sm:$0xff]
    %v1408 = vld [vmem:[#allocation5 + $0x58] sm:$0xff]
    %v1409 = vld [vmem:[#allocation5 + $0x60] sm:$0xff]
    %v1410 = vld [vmem:[#allocation5 + $0x68] sm:$0xff]
    %v1411 = vld [vmem:[#allocation5 + $0x70] sm:$0xff]
    %v1412 = vld [vmem:[#allocation5 + $0x78] sm:$0xff]
    %v1421 = vunpack.c.l.b16 %v1405
    %v1422 = vunpack.c.h.b16 %v1405
    %v1423 = vunpack.c.l.b16 %v1406
    %v1424 = vunpack.c.h.b16 %v1406
    %v1425 = vunpack.c.l.b16 %v1407
    %v1426 = vunpack.c.h.b16 %v1407
    %v1427 = vunpack.c.l.b16 %v1408
    %v1428 = vunpack.c.h.b16 %v1408
    %v1429 = vunpack.c.l.b16 %v1409
    %v1430 = vunpack.c.h.b16 %v1409
    %v1431 = vunpack.c.l.b16 %v1410
    %v1432 = vunpack.c.h.b16 %v1410
    %v1433 = vunpack.c.l.b16 %v1411
    %v1434 = vunpack.c.h.b16 %v1411
    %v1435 = vunpack.c.l.b16 %v1412
    %v1436 = vunpack.c.h.b16 %v1412
    %v1437 = vpack.c.b16 %v1423, %v1421
    %v1438 = vpack.c.b16 %v1424, %v1422
    %v1439 = vpack.c.b16 %v1427, %v1425
    %v1440 = vpack.c.b16 %v1428, %v1426
    %v1441 = vpack.c.b16 %v1431, %v1429
    %v1442 = vpack.c.b16 %v1432, %v1430
    %v1443 = vpack.c.b16 %v1435, %v1433
    %v1444 = vpack.c.b16 %v1436, %v1434
    %vm1453 = vcmask 523264
    %v1455 = vsel %vm1453, %v1404, 0
    %1457 = vmatprep.subr.bf16.mxu0 %v1438
    %1458 = vmatpush1.bf16.msra.mxu0 %v1437
    %1459 = vmatprep.subr.bf16.mxu0 %v1440
    %1460 = vmatpush1.bf16.msra.mxu0 %v1439
    %1461 = vmatprep.subr.bf16.mxu0 %v1442
    %1462 = vmatpush1.bf16.msra.mxu0 %v1441
    %1463 = vmatprep.subr.bf16.mxu0 %v1444
    %1464 = vmatpush1.bf16.msra.mxu0 %v1443
    %1465 = vmatprep.subr.bf16.mxu0 0
    %1466 = vmatpush1.bf16.msra.mxu0 0
    %1467 = vmatprep.subr.bf16.mxu0 0
    %1468 = vmatpush1.bf16.msra.mxu0 0
    %1469 = vmatprep.subr.bf16.mxu0 0
    %1470 = vmatpush1.bf16.msra.mxu0 0
    %1471 = vmatprep.subr.bf16.mxu0 0
    %1472 = vmatpush1.bf16.msra.mxu0 0
    %1473 = vmatprep.subr.bf16.mxu0 0
    %1474 = vmatpush1.bf16.msra.mxu0 0
    %1475 = vmatprep.subr.bf16.mxu0 0
    %1476 = vmatpush1.bf16.msra.mxu0 0
    %1477 = vmatprep.subr.bf16.mxu0 0
    %1478 = vmatpush1.bf16.msra.mxu0 0
    %1479 = vmatprep.subr.bf16.mxu0 0
    %1480 = vmatpush1.bf16.msra.mxu0 0
    %1481 = vmatprep.subr.bf16.mxu0 0
    %1482 = vmatpush1.bf16.msra.mxu0 0
    %1483 = vmatprep.subr.bf16.mxu0 0
    %1484 = vmatpush1.bf16.msra.mxu0 0
    %1485 = vmatprep.subr.bf16.mxu0 0
    %1486 = vmatpush1.bf16.msra.mxu0 0
    %1487 = vmatprep.subr.bf16.mxu0 0
    %1488 = vmatpush1.bf16.msra.mxu0 0
    %1489 = vmatprep.mubr.bf16.mxu0 0
    %1490 = vmatmul.mubr.bf16.gmra.mrb[0].mxu0 %v1455
    %v1491 = vpop.f32.mrb[0].mxu0
    %v1492 = vadd.f32 0.0, %v1491
    %v1493 = vpop.f32.mrb[0].mxu0
    %v1494 = vadd.f32 0.0, %v1493
    %v1495 = vpop.f32.mrb[0].mxu0
    %v1496 = vpop.f32.mrb[0].mxu0
    %1497 = vdwg.mxu0
    %v1506 = vunpack.c.l.b16 %v1396
    %v1507 = vunpack.c.h.b16 %v1396
    %v1508 = vunpack.c.l.b16 %v1397
    %v1509 = vunpack.c.h.b16 %v1397
    %v1510 = vunpack.c.l.b16 %v1398
    %v1511 = vunpack.c.h.b16 %v1398
    %v1512 = vunpack.c.l.b16 %v1399
    %v1513 = vunpack.c.h.b16 %v1399
    %v1514 = vunpack.c.l.b16 %v1400
    %v1515 = vunpack.c.h.b16 %v1400
    %v1516 = vunpack.c.l.b16 %v1401
    %v1517 = vunpack.c.h.b16 %v1401
    %v1518 = vunpack.c.l.b16 %v1402
    %v1519 = vunpack.c.h.b16 %v1402
    %v1520 = vunpack.c.l.b16 %v1403
    %v1521 = vunpack.c.h.b16 %v1403
    %v1522 = vpack.c.b16 %v1508, %v1506
    %v1523 = vpack.c.b16 %v1509, %v1507
    %v1524 = vpack.c.b16 %v1512, %v1510
    %v1525 = vpack.c.b16 %v1513, %v1511
    %v1526 = vpack.c.b16 %v1516, %v1514
    %v1527 = vpack.c.b16 %v1517, %v1515
    %v1528 = vpack.c.b16 %v1520, %v1518
    %v1529 = vpack.c.b16 %v1521, %v1519
    %v1539 = vsel %vm1453, %v1395, 0
    %1541 = vmatprep.subr.bf16.mxu0 %v1523
    %1542 = vmatpush1.bf16.msra.mxu0 %v1522
    %1543 = vmatprep.subr.bf16.mxu0 %v1525
    %1544 = vmatpush1.bf16.msra.mxu0 %v1524
    %1545 = vmatprep.subr.bf16.mxu0 %v1527
    %1546 = vmatpush1.bf16.msra.mxu0 %v1526
    %1547 = vmatprep.subr.bf16.mxu0 %v1529
    %1548 = vmatpush1.bf16.msra.mxu0 %v1528
    %1549 = vmatprep.subr.bf16.mxu0 0
    %1550 = vmatpush1.bf16.msra.mxu0 0
    %1551 = vmatprep.subr.bf16.mxu0 0
    %1552 = vmatpush1.bf16.msra.mxu0 0
    %1553 = vmatprep.subr.bf16.mxu0 0
    %1554 = vmatpush1.bf16.msra.mxu0 0
    %1555 = vmatprep.subr.bf16.mxu0 0
    %1556 = vmatpush1.bf16.msra.mxu0 0
    %1557 = vmatprep.subr.bf16.mxu0 0
    %1558 = vmatpush1.bf16.msra.mxu0 0
    %1559 = vmatprep.subr.bf16.mxu0 0
    %1560 = vmatpush1.bf16.msra.mxu0 0
    %1561 = vmatprep.subr.bf16.mxu0 0
    %1562 = vmatpush1.bf16.msra.mxu0 0
    %1563 = vmatprep.subr.bf16.mxu0 0
    %1564 = vmatpush1.bf16.msra.mxu0 0
    %1565 = vmatprep.subr.bf16.mxu0 0
    %1566 = vmatpush1.bf16.msra.mxu0 0
    %1567 = vmatprep.subr.bf16.mxu0 0
    %1568 = vmatpush1.bf16.msra.mxu0 0
    %1569 = vmatprep.subr.bf16.mxu0 0
    %1570 = vmatpush1.bf16.msra.mxu0 0
    %1571 = vmatprep.subr.bf16.mxu0 0
    %1572 = vmatpush1.bf16.msra.mxu0 0
    %1573 = vmatprep.mubr.bf16.mxu0 0
    %1574 = vmatmul.mubr.bf16.gmra.mrb[0].mxu0 %v1539
    %v1575 = vpop.f32.mrb[0].mxu0
    %v1576 = vadd.f32 %v1492, %v1575
    %v1577 = vpop.f32.mrb[0].mxu0
    %v1578 = vadd.f32 %v1494, %v1577
    %v1579 = vpop.f32.mrb[0].mxu0
    %v1580 = vpop.f32.mrb[0].mxu0
    %1581 = vdwg.mxu0
    %v1582 = vpack.c.bf16 %v1366, %v1366
    %v1583 = vld [vmem:[#allocation5 + $0x80] sm:$0xff]
    %v1584 = vld [vmem:[#allocation5 + $0x88] sm:$0xff]
    %v1585 = vld [vmem:[#allocation5 + $0x90] sm:$0xff]
    %v1586 = vld [vmem:[#allocation5 + $0x98] sm:$0xff]
    %v1587 = vld [vmem:[#allocation5 + $0xa0] sm:$0xff]
    %v1588 = vld [vmem:[#allocation5 + $0xa8] sm:$0xff]
    %v1589 = vld [vmem:[#allocation5 + $0xb0] sm:$0xff]
    %v1590 = vld [vmem:[#allocation5 + $0xb8] sm:$0xff]
    %v1599 = vunpack.c.l.b16 %v1583
    %v1600 = vunpack.c.h.b16 %v1583
    %v1601 = vunpack.c.l.b16 %v1584
    %v1602 = vunpack.c.h.b16 %v1584
    %v1603 = vunpack.c.l.b16 %v1585
    %v1604 = vunpack.c.h.b16 %v1585
    %v1605 = vunpack.c.l.b16 %v1586
    %v1606 = vunpack.c.h.b16 %v1586
    %v1607 = vunpack.c.l.b16 %v1587
    %v1608 = vunpack.c.h.b16 %v1587
    %v1609 = vunpack.c.l.b16 %v1588
    %v1610 = vunpack.c.h.b16 %v1588
    %v1611 = vunpack.c.l.b16 %v1589
    %v1612 = vunpack.c.h.b16 %v1589
    %v1613 = vunpack.c.l.b16 %v1590
    %v1614 = vunpack.c.h.b16 %v1590
    %v1615 = vpack.c.b16 %v1601, %v1599
    %v1616 = vpack.c.b16 %v1602, %v1600
    %v1617 = vpack.c.b16 %v1605, %v1603
    %v1618 = vpack.c.b16 %v1606, %v1604
    %v1619 = vpack.c.b16 %v1609, %v1607
    %v1620 = vpack.c.b16 %v1610, %v1608
    %v1621 = vpack.c.b16 %v1613, %v1611
    %v1622 = vpack.c.b16 %v1614, %v1612
    %v1632 = vsel %vm1453, %v1582, 0
    %1634 = vmatprep.subr.bf16.mxu0 %v1616
    %1635 = vmatpush1.bf16.msra.mxu0 %v1615
    %1636 = vmatprep.subr.bf16.mxu0 %v1618
    %1637 = vmatpush1.bf16.msra.mxu0 %v1617
    %1638 = vmatprep.subr.bf16.mxu0 %v1620
    %1639 = vmatpush1.bf16.msra.mxu0 %v1619
    %1640 = vmatprep.subr.bf16.mxu0 %v1622
    %1641 = vmatpush1.bf16.msra.mxu0 %v1621
    %1642 = vmatprep.subr.bf16.mxu0 0
    %1643 = vmatpush1.bf16.msra.mxu0 0
    %1644 = vmatprep.subr.bf16.mxu0 0
    %1645 = vmatpush1.bf16.msra.mxu0 0
    %1646 = vmatprep.subr.bf16.mxu0 0
    %1647 = vmatpush1.bf16.msra.mxu0 0
    %1648 = vmatprep.subr.bf16.mxu0 0
    %1649 = vmatpush1.bf16.msra.mxu0 0
    %1650 = vmatprep.subr.bf16.mxu0 0
    %1651 = vmatpush1.bf16.msra.mxu0 0
    %1652 = vmatprep.subr.bf16.mxu0 0
    %1653 = vmatpush1.bf16.msra.mxu0 0
    %1654 = vmatprep.subr.bf16.mxu0 0
    %1655 = vmatpush1.bf16.msra.mxu0 0
    %1656 = vmatprep.subr.bf16.mxu0 0
    %1657 = vmatpush1.bf16.msra.mxu0 0
    %1658 = vmatprep.subr.bf16.mxu0 0
    %1659 = vmatpush1.bf16.msra.mxu0 0
    %1660 = vmatprep.subr.bf16.mxu0 0
    %1661 = vmatpush1.bf16.msra.mxu0 0
    %1662 = vmatprep.subr.bf16.mxu0 0
    %1663 = vmatpush1.bf16.msra.mxu0 0
    %1664 = vmatprep.subr.bf16.mxu0 0
    %1665 = vmatpush1.bf16.msra.mxu0 0
    %1666 = vmatprep.mubr.bf16.mxu0 0
    %1667 = vmatmul.mubr.bf16.gmra.mrb[0].mxu0 %v1632
    %v1668 = vpop.f32.mrb[0].mxu0
    %v1669 = vadd.f32 0.0, %v1668
    %v1670 = vpop.f32.mrb[0].mxu0
    %v1671 = vadd.f32 0.0, %v1670
    %v1672 = vpop.f32.mrb[0].mxu0
    %v1673 = vpop.f32.mrb[0].mxu0
    %1674 = vdwg.mxu0
    %v1675 = vadd.f32 %v1576, %v1669
    %v1676 = vadd.f32 %v1578, %v1671
    %v1677 = vpack.c.bf16 %v1369, %v1369
    %v1678 = vld [vmem:[#allocation5 + $0xc0] sm:$0xff]
    %v1679 = vld [vmem:[#allocation5 + $0xc8] sm:$0xff]
    %v1680 = vld [vmem:[#allocation5 + $0xd0] sm:$0xff]
    %v1681 = vld [vmem:[#allocation5 + $0xd8] sm:$0xff]
    %v1682 = vld [vmem:[#allocation5 + $0xe0] sm:$0xff]
    %v1683 = vld [vmem:[#allocation5 + $0xe8] sm:$0xff]
    %v1684 = vld [vmem:[#allocation5 + $0xf0] sm:$0xff]
    %v1685 = vld [vmem:[#allocation5 + $0xf8] sm:$0xff]
    %v1694 = vunpack.c.l.b16 %v1678
    %v1695 = vunpack.c.h.b16 %v1678
    %v1696 = vunpack.c.l.b16 %v1679
    %v1697 = vunpack.c.h.b16 %v1679
    %v1698 = vunpack.c.l.b16 %v1680
    %v1699 = vunpack.c.h.b16 %v1680
    %v1700 = vunpack.c.l.b16 %v1681
    %v1701 = vunpack.c.h.b16 %v1681
    %v1702 = vunpack.c.l.b16 %v1682
    %v1703 = vunpack.c.h.b16 %v1682
    %v1704 = vunpack.c.l.b16 %v1683
    %v1705 = vunpack.c.h.b16 %v1683
    %v1706 = vunpack.c.l.b16 %v1684
    %v1707 = vunpack.c.h.b16 %v1684
    %v1708 = vunpack.c.l.b16 %v1685
    %v1709 = vunpack.c.h.b16 %v1685
    %v1710 = vpack.c.b16 %v1696, %v1694
    %v1711 = vpack.c.b16 %v1697, %v1695
    %v1712 = vpack.c.b16 %v1700, %v1698
    %v1713 = vpack.c.b16 %v1701, %v1699
    %v1714 = vpack.c.b16 %v1704, %v1702
    %v1715 = vpack.c.b16 %v1705, %v1703
    %v1716 = vpack.c.b16 %v1708, %v1706
    %v1717 = vpack.c.b16 %v1709, %v1707
    %v1727 = vsel %vm1453, %v1677, 0
    %1729 = vmatprep.subr.bf16.mxu0 %v1711
    %1730 = vmatpush1.bf16.msra.mxu0 %v1710
    %1731 = vmatprep.subr.bf16.mxu0 %v1713
    %1732 = vmatpush1.bf16.msra.mxu0 %v1712
    %1733 = vmatprep.subr.bf16.mxu0 %v1715
    %1734 = vmatpush1.bf16.msra.mxu0 %v1714
    %1735 = vmatprep.subr.bf16.mxu0 %v1717
    %1736 = vmatpush1.bf16.msra.mxu0 %v1716
    %1737 = vmatprep.subr.bf16.mxu0 0
    %1738 = vmatpush1.bf16.msra.mxu0 0
    %1739 = vmatprep.subr.bf16.mxu0 0
    %1740 = vmatpush1.bf16.msra.mxu0 0
    %1741 = vmatprep.subr.bf16.mxu0 0
    %1742 = vmatpush1.bf16.msra.mxu0 0
    %1743 = vmatprep.subr.bf16.mxu0 0
    %1744 = vmatpush1.bf16.msra.mxu0 0
    %1745 = vmatprep.subr.bf16.mxu0 0
    %1746 = vmatpush1.bf16.msra.mxu0 0
    %1747 = vmatprep.subr.bf16.mxu0 0
    %1748 = vmatpush1.bf16.msra.mxu0 0
    %1749 = vmatprep.subr.bf16.mxu0 0
    %1750 = vmatpush1.bf16.msra.mxu0 0
    %1751 = vmatprep.subr.bf16.mxu0 0
    %1752 = vmatpush1.bf16.msra.mxu0 0
    %1753 = vmatprep.subr.bf16.mxu0 0
    %1754 = vmatpush1.bf16.msra.mxu0 0
    %1755 = vmatprep.subr.bf16.mxu0 0
    %1756 = vmatpush1.bf16.msra.mxu0 0
    %1757 = vmatprep.subr.bf16.mxu0 0
    %1758 = vmatpush1.bf16.msra.mxu0 0
    %1759 = vmatprep.subr.bf16.mxu0 0
    %1760 = vmatpush1.bf16.msra.mxu0 0
    %1761 = vmatprep.mubr.bf16.mxu0 0
    %1762 = vmatmul.mubr.bf16.gmra.mrb[0].mxu0 %v1727
    %v1763 = vpop.f32.mrb[0].mxu0
    %v1764 = vadd.f32 0.0, %v1763
    %v1765 = vpop.f32.mrb[0].mxu0
    %v1766 = vadd.f32 0.0, %v1765
    %v1767 = vpop.f32.mrb[0].mxu0
    %v1768 = vpop.f32.mrb[0].mxu0
    %1769 = vdwg.mxu0
    %v1770 = vadd.f32 %v1675, %v1764
    %v1771 = vadd.f32 %v1676, %v1766
    %v1772 = vpack.c.bf16 %v1374, %v1374
    %v1773 = vld [vmem:[#allocation5 + $0x100] sm:$0xff]
    %v1774 = vld [vmem:[#allocation5 + $0x108] sm:$0xff]
    %v1775 = vld [vmem:[#allocation5 + $0x110] sm:$0xff]
    %v1776 = vld [vmem:[#allocation5 + $0x118] sm:$0xff]
    %v1777 = vld [vmem:[#allocation5 + $0x120] sm:$0xff]
    %v1778 = vld [vmem:[#allocation5 + $0x128] sm:$0xff]
    %v1779 = vld [vmem:[#allocation5 + $0x130] sm:$0xff]
    %v1780 = vld [vmem:[#allocation5 + $0x138] sm:$0xff]
    %v1789 = vunpack.c.l.b16 %v1773
    %v1790 = vunpack.c.h.b16 %v1773
    %v1791 = vunpack.c.l.b16 %v1774
    %v1792 = vunpack.c.h.b16 %v1774
    %v1793 = vunpack.c.l.b16 %v1775
    %v1794 = vunpack.c.h.b16 %v1775
    %v1795 = vunpack.c.l.b16 %v1776
    %v1796 = vunpack.c.h.b16 %v1776
    %v1797 = vunpack.c.l.b16 %v1777
    %v1798 = vunpack.c.h.b16 %v1777
    %v1799 = vunpack.c.l.b16 %v1778
    %v1800 = vunpack.c.h.b16 %v1778
    %v1801 = vunpack.c.l.b16 %v1779
    %v1802 = vunpack.c.h.b16 %v1779
    %v1803 = vunpack.c.l.b16 %v1780
    %v1804 = vunpack.c.h.b16 %v1780
    %v1805 = vpack.c.b16 %v1791, %v1789
    %v1806 = vpack.c.b16 %v1792, %v1790
    %v1807 = vpack.c.b16 %v1795, %v1793
    %v1808 = vpack.c.b16 %v1796, %v1794
    %v1809 = vpack.c.b16 %v1799, %v1797
    %v1810 = vpack.c.b16 %v1800, %v1798
    %v1811 = vpack.c.b16 %v1803, %v1801
    %v1812 = vpack.c.b16 %v1804, %v1802
    %v1822 = vsel %vm1453, %v1772, 0
    %1824 = vmatprep.subr.bf16.mxu0 %v1806
    %1825 = vmatpush1.bf16.msra.mxu0 %v1805
    %1826 = vmatprep.subr.bf16.mxu0 %v1808
    %1827 = vmatpush1.bf16.msra.mxu0 %v1807
    %1828 = vmatprep.subr.bf16.mxu0 %v1810
    %1829 = vmatpush1.bf16.msra.mxu0 %v1809
    %1830 = vmatprep.subr.bf16.mxu0 %v1812
    %1831 = vmatpush1.bf16.msra.mxu0 %v1811
    %1832 = vmatprep.subr.bf16.mxu0 0
    %1833 = vmatpush1.bf16.msra.mxu0 0
    %1834 = vmatprep.subr.bf16.mxu0 0
    %1835 = vmatpush1.bf16.msra.mxu0 0
    %1836 = vmatprep.subr.bf16.mxu0 0
    %1837 = vmatpush1.bf16.msra.mxu0 0
    %1838 = vmatprep.subr.bf16.mxu0 0
    %1839 = vmatpush1.bf16.msra.mxu0 0
    %1840 = vmatprep.subr.bf16.mxu0 0
    %1841 = vmatpush1.bf16.msra.mxu0 0
    %1842 = vmatprep.subr.bf16.mxu0 0
    %1843 = vmatpush1.bf16.msra.mxu0 0
    %1844 = vmatprep.subr.bf16.mxu0 0
    %1845 = vmatpush1.bf16.msra.mxu0 0
    %1846 = vmatprep.subr.bf16.mxu0 0
    %1847 = vmatpush1.bf16.msra.mxu0 0
    %1848 = vmatprep.subr.bf16.mxu0 0
    %1849 = vmatpush1.bf16.msra.mxu0 0
    %1850 = vmatprep.subr.bf16.mxu0 0
    %1851 = vmatpush1.bf16.msra.mxu0 0
    %1852 = vmatprep.subr.bf16.mxu0 0
    %1853 = vmatpush1.bf16.msra.mxu0 0
    %1854 = vmatprep.subr.bf16.mxu0 0
    %1855 = vmatpush1.bf16.msra.mxu0 0
    %1856 = vmatprep.mubr.bf16.mxu0 0
    %1857 = vmatmul.mubr.bf16.gmra.mrb[0].mxu0 %v1822
    %v1858 = vpop.f32.mrb[0].mxu0
    %v1859 = vadd.f32 0.0, %v1858
    %v1860 = vpop.f32.mrb[0].mxu0
    %v1861 = vadd.f32 0.0, %v1860
    %v1862 = vpop.f32.mrb[0].mxu0
    %v1863 = vpop.f32.mrb[0].mxu0
    %1864 = vdwg.mxu0
    %v1865 = vadd.f32 %v1770, %v1859
    %v1866 = vadd.f32 %v1771, %v1861
    %v1867 = vpack.c.bf16 %v1377, %v1377
    %v1868 = vld [vmem:[#allocation5 + $0x140] sm:$0xff]
    %v1869 = vld [vmem:[#allocation5 + $0x148] sm:$0xff]
    %v1870 = vld [vmem:[#allocation5 + $0x150] sm:$0xff]
    %v1871 = vld [vmem:[#allocation5 + $0x158] sm:$0xff]
    %v1872 = vld [vmem:[#allocation5 + $0x160] sm:$0xff]
    %v1873 = vld [vmem:[#allocation5 + $0x168] sm:$0xff]
    %v1874 = vld [vmem:[#allocation5 + $0x170] sm:$0xff]
    %v1875 = vld [vmem:[#allocation5 + $0x178] sm:$0xff]
    %v1884 = vunpack.c.l.b16 %v1868
    %v1885 = vunpack.c.h.b16 %v1868
    %v1886 = vunpack.c.l.b16 %v1869
    %v1887 = vunpack.c.h.b16 %v1869
    %v1888 = vunpack.c.l.b16 %v1870
    %v1889 = vunpack.c.h.b16 %v1870
    %v1890 = vunpack.c.l.b16 %v1871
    %v1891 = vunpack.c.h.b16 %v1871
    %v1892 = vunpack.c.l.b16 %v1872
    %v1893 = vunpack.c.h.b16 %v1872
    %v1894 = vunpack.c.l.b16 %v1873
    %v1895 = vunpack.c.h.b16 %v1873
    %v1896 = vunpack.c.l.b16 %v1874
    %v1897 = vunpack.c.h.b16 %v1874
    %v1898 = vunpack.c.l.b16 %v1875
    %v1899 = vunpack.c.h.b16 %v1875
    %v1900 = vpack.c.b16 %v1886, %v1884
    %v1901 = vpack.c.b16 %v1887, %v1885
    %v1902 = vpack.c.b16 %v1890, %v1888
    %v1903 = vpack.c.b16 %v1891, %v1889
    %v1904 = vpack.c.b16 %v1894, %v1892
    %v1905 = vpack.c.b16 %v1895, %v1893
    %v1906 = vpack.c.b16 %v1898, %v1896
    %v1907 = vpack.c.b16 %v1899, %v1897
    %v1917 = vsel %vm1453, %v1867, 0
    %1919 = vmatprep.subr.bf16.mxu0 %v1901
    %1920 = vmatpush1.bf16.msra.mxu0 %v1900
    %1921 = vmatprep.subr.bf16.mxu0 %v1903
    %1922 = vmatpush1.bf16.msra.mxu0 %v1902
    %1923 = vmatprep.subr.bf16.mxu0 %v1905
    %1924 = vmatpush1.bf16.msra.mxu0 %v1904
    %1925 = vmatprep.subr.bf16.mxu0 %v1907
    %1926 = vmatpush1.bf16.msra.mxu0 %v1906
    %1927 = vmatprep.subr.bf16.mxu0 0
    %1928 = vmatpush1.bf16.msra.mxu0 0
    %1929 = vmatprep.subr.bf16.mxu0 0
    %1930 = vmatpush1.bf16.msra.mxu0 0
    %1931 = vmatprep.subr.bf16.mxu0 0
    %1932 = vmatpush1.bf16.msra.mxu0 0
    %1933 = vmatprep.subr.bf16.mxu0 0
    %1934 = vmatpush1.bf16.msra.mxu0 0
    %1935 = vmatprep.subr.bf16.mxu0 0
    %1936 = vmatpush1.bf16.msra.mxu0 0
    %1937 = vmatprep.subr.bf16.mxu0 0
    %1938 = vmatpush1.bf16.msra.mxu0 0
    %1939 = vmatprep.subr.bf16.mxu0 0
    %1940 = vmatpush1.bf16.msra.mxu0 0
    %1941 = vmatprep.subr.bf16.mxu0 0
    %1942 = vmatpush1.bf16.msra.mxu0 0
    %1943 = vmatprep.subr.bf16.mxu0 0
    %1944 = vmatpush1.bf16.msra.mxu0 0
    %1945 = vmatprep.subr.bf16.mxu0 0
    %1946 = vmatpush1.bf16.msra.mxu0 0
    %1947 = vmatprep.subr.bf16.mxu0 0
    %1948 = vmatpush1.bf16.msra.mxu0 0
    %1949 = vmatprep.subr.bf16.mxu0 0
    %1950 = vmatpush1.bf16.msra.mxu0 0
    %1951 = vmatprep.mubr.bf16.mxu0 0
    %1952 = vmatmul.mubr.bf16.gmra.mrb[0].mxu0 %v1917
    %v1953 = vpop.f32.mrb[0].mxu0
    %v1954 = vadd.f32 0.0, %v1953
    %v1955 = vpop.f32.mrb[0].mxu0
    %v1956 = vadd.f32 0.0, %v1955
    %v1957 = vpop.f32.mrb[0].mxu0
    %v1958 = vpop.f32.mrb[0].mxu0
    %1959 = vdwg.mxu0
    %v1960 = vadd.f32 %v1865, %v1954
    %v1961 = vadd.f32 %v1866, %v1956
    %v1962 = vpack.c.bf16 %v1382, %v1382
    %v1963 = vld [vmem:[#allocation5 + $0x180] sm:$0xff]
    %v1964 = vld [vmem:[#allocation5 + $0x188] sm:$0xff]
    %v1965 = vld [vmem:[#allocation5 + $0x190] sm:$0xff]
    %v1966 = vld [vmem:[#allocation5 + $0x198] sm:$0xff]
    %v1967 = vld [vmem:[#allocation5 + $0x1a0] sm:$0xff]
    %v1968 = vld [vmem:[#allocation5 + $0x1a8] sm:$0xff]
    %v1969 = vld [vmem:[#allocation5 + $0x1b0] sm:$0xff]
    %v1970 = vld [vmem:[#allocation5 + $0x1b8] sm:$0xff]
    %v1979 = vunpack.c.l.b16 %v1963
    %v1980 = vunpack.c.h.b16 %v1963
    %v1981 = vunpack.c.l.b16 %v1964
    %v1982 = vunpack.c.h.b16 %v1964
    %v1983 = vunpack.c.l.b16 %v1965
    %v1984 = vunpack.c.h.b16 %v1965
    %v1985 = vunpack.c.l.b16 %v1966
    %v1986 = vunpack.c.h.b16 %v1966
    %v1987 = vunpack.c.l.b16 %v1967
    %v1988 = vunpack.c.h.b16 %v1967
    %v1989 = vunpack.c.l.b16 %v1968
    %v1990 = vunpack.c.h.b16 %v1968
    %v1991 = vunpack.c.l.b16 %v1969
    %v1992 = vunpack.c.h.b16 %v1969
    %v1993 = vunpack.c.l.b16 %v1970
    %v1994 = vunpack.c.h.b16 %v1970
    %v1995 = vpack.c.b16 %v1981, %v1979
    %v1996 = vpack.c.b16 %v1982, %v1980
    %v1997 = vpack.c.b16 %v1985, %v1983
    %v1998 = vpack.c.b16 %v1986, %v1984
    %v1999 = vpack.c.b16 %v1989, %v1987
    %v2000 = vpack.c.b16 %v1990, %v1988
    %v2001 = vpack.c.b16 %v1993, %v1991
    %v2002 = vpack.c.b16 %v1994, %v1992
    %v2012 = vsel %vm1453, %v1962, 0
    %2014 = vmatprep.subr.bf16.mxu0 %v1996
    %2015 = vmatpush1.bf16.msra.mxu0 %v1995
    %2016 = vmatprep.subr.bf16.mxu0 %v1998
    %2017 = vmatpush1.bf16.msra.mxu0 %v1997
    %2018 = vmatprep.subr.bf16.mxu0 %v2000
    %2019 = vmatpush1.bf16.msra.mxu0 %v1999
    %2020 = vmatprep.subr.bf16.mxu0 %v2002
    %2021 = vmatpush1.bf16.msra.mxu0 %v2001
    %2022 = vmatprep.subr.bf16.mxu0 0
    %2023 = vmatpush1.bf16.msra.mxu0 0
    %2024 = vmatprep.subr.bf16.mxu0 0
    %2025 = vmatpush1.bf16.msra.mxu0 0
    %2026 = vmatprep.subr.bf16.mxu0 0
    %2027 = vmatpush1.bf16.msra.mxu0 0
    %2028 = vmatprep.subr.bf16.mxu0 0
    %2029 = vmatpush1.bf16.msra.mxu0 0
    %2030 = vmatprep.subr.bf16.mxu0 0
    %2031 = vmatpush1.bf16.msra.mxu0 0
    %2032 = vmatprep.subr.bf16.mxu0 0
    %2033 = vmatpush1.bf16.msra.mxu0 0
    %2034 = vmatprep.subr.bf16.mxu0 0
    %2035 = vmatpush1.bf16.msra.mxu0 0
    %2036 = vmatprep.subr.bf16.mxu0 0
    %2037 = vmatpush1.bf16.msra.mxu0 0
    %2038 = vmatprep.subr.bf16.mxu0 0
    %2039 = vmatpush1.bf16.msra.mxu0 0
    %2040 = vmatprep.subr.bf16.mxu0 0
    %2041 = vmatpush1.bf16.msra.mxu0 0
    %2042 = vmatprep.subr.bf16.mxu0 0
    %2043 = vmatpush1.bf16.msra.mxu0 0
    %2044 = vmatprep.subr.bf16.mxu0 0
    %2045 = vmatpush1.bf16.msra.mxu0 0
    %2046 = vmatprep.mubr.bf16.mxu0 0
    %2047 = vmatmul.mubr.bf16.gmra.mrb[0].mxu0 %v2012
    %v2048 = vpop.f32.mrb[0].mxu0
    %v2049 = vadd.f32 0.0, %v2048
    %v2050 = vpop.f32.mrb[0].mxu0
    %v2051 = vadd.f32 0.0, %v2050
    %v2052 = vpop.f32.mrb[0].mxu0
    %v2053 = vpop.f32.mrb[0].mxu0
    %2054 = vdwg.mxu0
    %v2055 = vadd.f32 %v1960, %v2049
    %v2056 = vadd.f32 %v1961, %v2051
    %v2057 = vpack.c.bf16 %v1385, %v1385
    %v2058 = vld [vmem:[#allocation5 + $0x1c0] sm:$0xff]
    %v2059 = vld [vmem:[#allocation5 + $0x1c8] sm:$0xff]
    %v2060 = vld [vmem:[#allocation5 + $0x1d0] sm:$0xff]
    %v2061 = vld [vmem:[#allocation5 + $0x1d8] sm:$0xff]
    %v2062 = vld [vmem:[#allocation5 + $0x1e0] sm:$0xff]
    %v2063 = vld [vmem:[#allocation5 + $0x1e8] sm:$0xff]
    %v2064 = vld [vmem:[#allocation5 + $0x1f0] sm:$0xff]
    %v2065 = vld [vmem:[#allocation5 + $0x1f8] sm:$0xff]
    %v2074 = vunpack.c.l.b16 %v2058
    %v2075 = vunpack.c.h.b16 %v2058
    %v2076 = vunpack.c.l.b16 %v2059
    %v2077 = vunpack.c.h.b16 %v2059
    %v2078 = vunpack.c.l.b16 %v2060
    %v2079 = vunpack.c.h.b16 %v2060
    %v2080 = vunpack.c.l.b16 %v2061
    %v2081 = vunpack.c.h.b16 %v2061
    %v2082 = vunpack.c.l.b16 %v2062
    %v2083 = vunpack.c.h.b16 %v2062
    %v2084 = vunpack.c.l.b16 %v2063
    %v2085 = vunpack.c.h.b16 %v2063
    %v2086 = vunpack.c.l.b16 %v2064
    %v2087 = vunpack.c.h.b16 %v2064
    %v2088 = vunpack.c.l.b16 %v2065
    %v2089 = vunpack.c.h.b16 %v2065
    %v2090 = vpack.c.b16 %v2076, %v2074
    %v2091 = vpack.c.b16 %v2077, %v2075
    %v2092 = vpack.c.b16 %v2080, %v2078
    %v2093 = vpack.c.b16 %v2081, %v2079
    %v2094 = vpack.c.b16 %v2084, %v2082
    %v2095 = vpack.c.b16 %v2085, %v2083
    %v2096 = vpack.c.b16 %v2088, %v2086
    %v2097 = vpack.c.b16 %v2089, %v2087
    %v2107 = vsel %vm1453, %v2057, 0
    %2109 = vmatprep.subr.bf16.mxu0 %v2091
    %2110 = vmatpush1.bf16.msra.mxu0 %v2090
    %2111 = vmatprep.subr.bf16.mxu0 %v2093
    %2112 = vmatpush1.bf16.msra.mxu0 %v2092
    %2113 = vmatprep.subr.bf16.mxu0 %v2095
    %2114 = vmatpush1.bf16.msra.mxu0 %v2094
    %2115 = vmatprep.subr.bf16.mxu0 %v2097
    %2116 = vmatpush1.bf16.msra.mxu0 %v2096
    %2117 = vmatprep.subr.bf16.mxu0 0
    %2118 = vmatpush1.bf16.msra.mxu0 0
    %2119 = vmatprep.subr.bf16.mxu0 0
    %2120 = vmatpush1.bf16.msra.mxu0 0
    %2121 = vmatprep.subr.bf16.mxu0 0
    %2122 = vmatpush1.bf16.msra.mxu0 0
    %2123 = vmatprep.subr.bf16.mxu0 0
    %2124 = vmatpush1.bf16.msra.mxu0 0
    %2125 = vmatprep.subr.bf16.mxu0 0
    %2126 = vmatpush1.bf16.msra.mxu0 0
    %2127 = vmatprep.subr.bf16.mxu0 0
    %2128 = vmatpush1.bf16.msra.mxu0 0
    %2129 = vmatprep.subr.bf16.mxu0 0
    %2130 = vmatpush1.bf16.msra.mxu0 0
    %2131 = vmatprep.subr.bf16.mxu0 0
    %2132 = vmatpush1.bf16.msra.mxu0 0
    %2133 = vmatprep.subr.bf16.mxu0 0
    %2134 = vmatpush1.bf16.msra.mxu0 0
    %2135 = vmatprep.subr.bf16.mxu0 0
    %2136 = vmatpush1.bf16.msra.mxu0 0
    %2137 = vmatprep.subr.bf16.mxu0 0
    %2138 = vmatpush1.bf16.msra.mxu0 0
    %2139 = vmatprep.subr.bf16.mxu0 0
    %2140 = vmatpush1.bf16.msra.mxu0 0
    %2141 = vmatprep.mubr.bf16.mxu0 0
    %2142 = vmatmul.mubr.bf16.gmra.mrb[0].mxu0 %v2107
    %v2143 = vpop.f32.mrb[0].mxu0
    %v2144 = vadd.f32 0.0, %v2143
    %v2145 = vpop.f32.mrb[0].mxu0
    %v2146 = vadd.f32 0.0, %v2145
    %v2147 = vpop.f32.mrb[0].mxu0
    %v2148 = vpop.f32.mrb[0].mxu0
    %2149 = vdwg.mxu0
    %v2150 = vadd.f32 %v2055, %v2144
    %v2151 = vadd.f32 %v2056, %v2146
    %v2152 = vpack.c.bf16 %v1390, %v1390
    %v2153 = vld [vmem:[#allocation5 + $0x200] sm:$0xff]
    %v2154 = vld [vmem:[#allocation5 + $0x208] sm:$0xff]
    %v2155 = vld [vmem:[#allocation5 + $0x210] sm:$0xff]
    %v2156 = vld [vmem:[#allocation5 + $0x218] sm:$0xff]
    %v2157 = vld [vmem:[#allocation5 + $0x220] sm:$0xff]
    %v2158 = vld [vmem:[#allocation5 + $0x228] sm:$0xff]
    %v2159 = vld [vmem:[#allocation5 + $0x230] sm:$0xff]
    %v2160 = vld [vmem:[#allocation5 + $0x238] sm:$0xff]
    %v2169 = vunpack.c.l.b16 %v2153
    %v2170 = vunpack.c.h.b16 %v2153
    %v2171 = vunpack.c.l.b16 %v2154
    %v2172 = vunpack.c.h.b16 %v2154
    %v2173 = vunpack.c.l.b16 %v2155
    %v2174 = vunpack.c.h.b16 %v2155
    %v2175 = vunpack.c.l.b16 %v2156
    %v2176 = vunpack.c.h.b16 %v2156
    %v2177 = vunpack.c.l.b16 %v2157
    %v2178 = vunpack.c.h.b16 %v2157
    %v2179 = vunpack.c.l.b16 %v2158
    %v2180 = vunpack.c.h.b16 %v2158
    %v2181 = vunpack.c.l.b16 %v2159
    %v2182 = vunpack.c.h.b16 %v2159
    %v2183 = vunpack.c.l.b16 %v2160
    %v2184 = vunpack.c.h.b16 %v2160
    %v2185 = vpack.c.b16 %v2171, %v2169
    %v2186 = vpack.c.b16 %v2172, %v2170
    %v2187 = vpack.c.b16 %v2175, %v2173
    %v2188 = vpack.c.b16 %v2176, %v2174
    %v2189 = vpack.c.b16 %v2179, %v2177
    %v2190 = vpack.c.b16 %v2180, %v2178
    %v2191 = vpack.c.b16 %v2183, %v2181
    %v2192 = vpack.c.b16 %v2184, %v2182
    %v2202 = vsel %vm1453, %v2152, 0
    %2204 = vmatprep.subr.bf16.mxu0 %v2186
    %2205 = vmatpush1.bf16.msra.mxu0 %v2185
    %2206 = vmatprep.subr.bf16.mxu0 %v2188
    %2207 = vmatpush1.bf16.msra.mxu0 %v2187
    %2208 = vmatprep.subr.bf16.mxu0 %v2190
    %2209 = vmatpush1.bf16.msra.mxu0 %v2189
    %2210 = vmatprep.subr.bf16.mxu0 %v2192
    %2211 = vmatpush1.bf16.msra.mxu0 %v2191
    %2212 = vmatprep.subr.bf16.mxu0 0
    %2213 = vmatpush1.bf16.msra.mxu0 0
    %2214 = vmatprep.subr.bf16.mxu0 0
    %2215 = vmatpush1.bf16.msra.mxu0 0
    %2216 = vmatprep.subr.bf16.mxu0 0
    %2217 = vmatpush1.bf16.msra.mxu0 0
    %2218 = vmatprep.subr.bf16.mxu0 0
    %2219 = vmatpush1.bf16.msra.mxu0 0
    %2220 = vmatprep.subr.bf16.mxu0 0
    %2221 = vmatpush1.bf16.msra.mxu0 0
    %2222 = vmatprep.subr.bf16.mxu0 0
    %2223 = vmatpush1.bf16.msra.mxu0 0
    %2224 = vmatprep.subr.bf16.mxu0 0
    %2225 = vmatpush1.bf16.msra.mxu0 0
    %2226 = vmatprep.subr.bf16.mxu0 0
    %2227 = vmatpush1.bf16.msra.mxu0 0
    %2228 = vmatprep.subr.bf16.mxu0 0
    %2229 = vmatpush1.bf16.msra.mxu0 0
    %2230 = vmatprep.subr.bf16.mxu0 0
    %2231 = vmatpush1.bf16.msra.mxu0 0
    %2232 = vmatprep.subr.bf16.mxu0 0
    %2233 = vmatpush1.bf16.msra.mxu0 0
    %2234 = vmatprep.subr.bf16.mxu0 0
    %2235 = vmatpush1.bf16.msra.mxu0 0
    %2236 = vmatprep.mubr.bf16.mxu0 0
    %2237 = vmatmul.mubr.bf16.gmra.mrb[0].mxu0 %v2202
    %v2238 = vpop.f32.mrb[0].mxu0
    %v2239 = vadd.f32 0.0, %v2238
    %v2240 = vpop.f32.mrb[0].mxu0
    %v2241 = vadd.f32 0.0, %v2240
    %v2242 = vpop.f32.mrb[0].mxu0
    %v2243 = vpop.f32.mrb[0].mxu0
    %2244 = vdwg.mxu0
    %v2245 = vadd.f32 %v2150, %v2239
    %v2246 = vadd.f32 %v2151, %v2241
    %2248 = vset.pattern.permute.xlu0 0
    %2249 = vperm.xlu0 %2248, %v664
    %v2250 = vpop.permute.xlu0 %2249
    %v2252 = vadd.f32 %v2245, %v2250
    %v2253 = vadd.f32 %v2246, %v2250
    %v2254 = vmax.f32 %v2252, 0.0
    %v2255 = vmax.f32 %v2253, 0.0
    %v2256 = vld [vmem:[#allocation2 + $0x1a0] sm:$0xf]
    %v2257 = vld [vmem:[%s2 + $0x28] sm:$0xff]
    %v2258 = vpack.c.bf16 %v2254, %v2254
    %v2259 = vpack.c.bf16 %v2255, %v2255
    %2261 = vset.pattern.permute.xlu0 0
    %2262 = vperm.xlu0 %2261, %v2257
    %v2263 = vpop.permute.xlu0 %2262
    %v2266 = vsel %vm698, %v2256, 0
    %v2269 = vsel %vm657, %v2258, 0
    %v2272 = vsel %vm657, %v2259, 0
    %2274 = vmatprep.subr.bf16.mxu0 %v2272
    %2275 = vmatpush1.bf16.msra.mxu0 %v2269
    %2276 = vmatprep.subr.bf16.mxu0 0
    %2277 = vmatpush1.bf16.msra.mxu0 0
    %2278 = vmatprep.subr.bf16.mxu0 0
    %2279 = vmatpush1.bf16.msra.mxu0 0
    %2280 = vmatprep.subr.bf16.mxu0 0
    %2281 = vmatpush1.bf16.msra.mxu0 0
    %2282 = vmatprep.subr.bf16.mxu0 0
    %2283 = vmatpush1.bf16.msra.mxu0 0
    %2284 = vmatprep.subr.bf16.mxu0 0
    %2285 = vmatpush1.bf16.msra.mxu0 0
    %2286 = vmatprep.subr.bf16.mxu0 0
    %2287 = vmatpush1.bf16.msra.mxu0 0
    %2288 = vmatprep.subr.bf16.mxu0 0
    %2289 = vmatpush1.bf16.msra.mxu0 0
    %2290 = vmatprep.subr.bf16.mxu0 0
    %2291 = vmatpush1.bf16.msra.mxu0 0
    %2292 = vmatprep.subr.bf16.mxu0 0
    %2293 = vmatpush1.bf16.msra.mxu0 0
    %2294 = vmatprep.subr.bf16.mxu0 0
    %2295 = vmatpush1.bf16.msra.mxu0 0
    %2296 = vmatprep.subr.bf16.mxu0 0
    %2297 = vmatpush1.bf16.msra.mxu0 0
    %2298 = vmatprep.subr.bf16.mxu0 0
    %2299 = vmatpush1.bf16.msra.mxu0 0
    %2300 = vmatprep.subr.bf16.mxu0 0
    %2301 = vmatpush1.bf16.msra.mxu0 0
    %2302 = vmatprep.subr.bf16.mxu0 0
    %2303 = vmatpush1.bf16.msra.mxu0 0
    %2304 = vmatprep.subr.bf16.mxu0 0
    %2305 = vmatpush1.bf16.msra.mxu0 0
    %2306 = vmatprep.mubr.bf16.mxu0 0
    %2307 = vmatmul.mubr.bf16.gmra.mrb[0].mxu0 %v2266
    %v2308 = vpop.f32.mrb[0].mxu0
    %v2309 = vadd.f32 %v2263, %v2308
    %v2310 = vpop.f32.mrb[0].mxu0
    %v2311 = vadd.f32 %v2263, %v2310
    %v2312 = vpop.f32.mrb[0].mxu0
    %v2313 = vpop.f32.mrb[0].mxu0
    %2314 = vdwg.mxu0
    %2315 = vst [vmem:[#allocation7] sm:$0xff] %v2309
    %2316 = vst [vmem:[#allocation7 + $0x8] sm:$0xff] %v2311
    // Predicated region
    $region30: #{tpu_custom_call.1} parent=1 // pred_check
      _
    $region31: #{tpu_custom_call.1} parent=1 // pred_check_branch
      %2318 = sbr.rel (0) target = $region33
    $region32: #{tpu_custom_call.1} parent=1 // pred_region
      %s2320 = ssub.s32 256, 256
      %2321 = vsyncadd [#allocation4], %s2320
      %s2323 = sshll.u32 [#allocation7], 4
      %s2324 = int_to_ptr.vmem [resolvable:$true] %s2323
      %2326 = dma.vmem_to_hbm [thread:$0]  %s2324, 256, %s5, [#allocation4]
    $region33: #{tpu_custom_call.1} parent=1 // pred_fallthru
      _
    // Predicated region
    $region34: #{tpu_custom_call.1} parent=1 // pred_check
      _
    $region35: #{tpu_custom_call.1} parent=1 // pred_check_branch
      %2328 = sbr.rel (0) target = $region37
    $region36: #{tpu_custom_call.1} parent=1 // pred_region
      %2329 = dma.done [#allocation4], 256
    $region37: #{tpu_custom_call.1} parent=1 // pred_fallthru
      _
    %2330 = vsyncpa [#allocation3], 1
    %2331 = vsyncpa [#allocation6], 1
    %2332 = vsyncpa [#allocation4], 1

</llo_original>
